<compile_context>
chip_gen: v7x
topology: tpu7x:2x2x1
jax: 0.10.0
libtpu: 0.0.40
codegen_flags: <defaults>
</compile_context>

<pallas_src>
import jax
import jax.numpy as jnp
from jax.experimental import pallas as pl
from jax.experimental.pallas import tpu as pltpu

BN_EPS = 1e-5
LANE = 128
ROW_BLK = 64                       # rows reserved per weight block in w_pack
OUT_DIMS = (64, 64, 32, 32, 32, 1)


# ---------------------------------------------------------------------------
# Kernel
# ---------------------------------------------------------------------------
def _make_kernel(input_dim, batch_real, batch_pad, use_bf16):
    in_dims = (input_dim, 64, 64, 32, 32, 32)
    inv_n = 1.0 / float(batch_real)                    # Python float -> literal
    mm_dtype = jnp.bfloat16 if use_bf16 else jnp.float32

    def kernel(x_ref, wp_ref, vp_ref, o_ref):
        # Masked ones-row (1, B_pad): 1.0 on real batch lanes, 0.0 on padding.
        # Built in-kernel (iota + compare against a Python int literal) so no
        # constant is captured and padded lanes never leak into statistics.
        lane = jax.lax.broadcasted_iota(jnp.int32, (1, batch_pad), 1)
        ones_row = (lane < batch_real).astype(jnp.float32)

        def bsum(a):
            # Masked lane-reduction on the MXU: (dout, B_pad) . (1, B_pad)^T
            # -> (dout, 1).  Contracting the last dim of both operands (same
            # pattern as q @ k^T) keeps the XLU free.
            return jax.lax.dot_general(
                a, ones_row, (((1,), (1,)), ((), ())),
                preferred_element_type=jnp.float32)

        h = x_ref[...].astype(mm_dtype)                # (F, B_pad), batch on lanes

        for l in range(6):
            dout, din = OUT_DIMS[l], in_dims[l]
            r0 = l * ROW_BLK
            w = wp_ref[r0:r0 + dout, 0:din]            # (dout, din) static slice

            # Bias is omitted for l<5: BatchNorm subtracts the batch mean, so
            # the Linear bias cancels exactly (bit-identical result).
            z = jnp.dot(w, h, preferred_element_type=jnp.float32)  # (dout, B_pad)

            if l < 5:
                g = vp_ref[0:dout, 2 * l:2 * l + 1]        # gamma (dout, 1)
                be = vp_ref[0:dout, 2 * l + 1:2 * l + 2]   # beta  (dout, 1)

                mu = bsum(z) * inv_n                       # (dout, 1)
                zc = z - mu
                var = bsum(zc * zc) * inv_n                # centered 2nd pass
                scale = g * jax.lax.rsqrt(var + BN_EPS)    # EUP rsqrt
                h = jnp.maximum(zc * scale + be, 0.0).astype(mm_dtype)
            else:
                b6 = vp_ref[0:dout, 10:11]                 # (1, 1)
                zz = z + b6
                o_ref[...] = 1.0 / (1.0 + jnp.exp(-zz))    # sigmoid, lane-dense

    return kernel


# ---------------------------------------------------------------------------
# Parameter handling (PyTorch layout: W (out,in), b/gamma/beta 1-D (out,))
# ---------------------------------------------------------------------------
def init_params(key, input_dim):
    """Deterministic init mirroring nn.Linear defaults + fresh BatchNorm1d."""
    dims = [(input_dim, 64), (64, 64), (64, 32), (32, 32), (32, 32), (32, 1)]
    params = []
    keys = jax.random.split(key, 2 * len(dims))
    for i, (din, dout) in enumerate(dims):
        bound = 1.0 / float(din) ** 0.5
        W = jax.random.uniform(keys[2 * i], (dout, din), jnp.float32, -bound, bound)
        b = jax.random.uniform(keys[2 * i + 1], (dout,), jnp.float32, -bound, bound)
        params += [W, b]
        if i < 5:   # BatchNorm affine: gamma=1, beta=0
            params += [jnp.ones((dout,), jnp.float32), jnp.zeros((dout,), jnp.float32)]
    return params   # [W1,b1,g1,be1, ..., W5,b5,g5,be5, W6,b6]


def pack_params(params, mm_dtype=jnp.float32):
    """Pack params into two buffers (one weight DMA, one vector DMA).

    w_pack: (6*64, in_pad) in mm_dtype (bf16 halves the weight DMA on
            bf16-native MXUs).  Row block l holds W_{l+1}.
    v_pack: (64, 16) f32.  Columns 2l/2l+1 = gamma_l/beta_l (l=0..4),
            column 10 = b6.  Linear biases of BN layers are not packed (they
            cancel against the batch mean).
    """
    Ws = [params[4 * l] for l in range(5)] + [params[20]]
    input_dim = Ws[0].shape[1]
    in_pad = max(64, input_dim)

    w_pack = jnp.zeros((6 * ROW_BLK, in_pad), mm_dtype)
    for l, W in enumerate(Ws):
        dout, din = W.shape
        w_pack = w_pack.at[l * ROW_BLK:l * ROW_BLK + dout, 0:din].set(
            W.astype(mm_dtype))

    v_pack = jnp.zeros((ROW_BLK, 16), jnp.float32)
    for l in range(5):
        g, be = params[4 * l + 2], params[4 * l + 3]
        d = g.shape[0]
        v_pack = v_pack.at[0:d, 2 * l].set(g.astype(jnp.float32))
        v_pack = v_pack.at[0:d, 2 * l + 1].set(be.astype(jnp.float32))
    v_pack = v_pack.at[0:1, 10].set(params[21].astype(jnp.float32))
    return w_pack, v_pack


# ---------------------------------------------------------------------------
# Wrapper
# ---------------------------------------------------------------------------
def fraud_detection_forward(x, params, use_bf16_matmul=False):
    """Forward pass.  Set use_bf16_matmul=True on v5e/v6e/v7x production runs
    (bf16-native MXU, f32 accumulation); default f32 keeps bit-tight parity
    with the reference."""
    batch, input_dim = x.shape
    batch_pad = max(LANE, ((batch + LANE - 1) // LANE) * LANE)
    mm_dtype = jnp.bfloat16 if use_bf16_matmul else jnp.float32

    w_pack, v_pack = pack_params(params, mm_dtype)

    # (F, B) batch-on-lanes layout; ~8x denser in VMEM than (B, F) for F~10.
    # TODO(synk): fuse transpose+pad into the pallas_call (allow_input_fusion)
    # to avoid the extra HBM round trip of x at large batch sizes.
    xt = jnp.transpose(x).astype(mm_dtype)
    if batch_pad != batch:
        xt = jnp.pad(xt, ((0, 0), (0, batch_pad - batch)))

    kernel = _make_kernel(input_dim, batch, batch_pad, use_bf16_matmul)
    vmem_spec = pl.BlockSpec(memory_space=pltpu.MemorySpace.VMEM)

    # 32 MiB scoped VMEM: comfortable on v5e/v6e (128 MiB physical, can be
    # raised towards ~100 MiB for huge single-call batches); on v7x (64 MiB
    # physical) this caps the single-block batch at roughly 30-50K rows —
    # beyond that use the batch-tiled two-phase-BN variant (see TODO above).
    out = pl.pallas_call(
        kernel,
        out_shape=jax.ShapeDtypeStruct((1, batch_pad), jnp.float32),
        in_specs=[vmem_spec] * 3,                         # x, w_pack, v_pack
        out_specs=vmem_spec,
        compiler_params=pltpu.CompilerParams(
            vmem_limit_bytes=32 * 1024 * 1024),
    )(xt, w_pack, v_pack)

    return out[:, :batch].T                               # (B, 1), PyTorch layout


# ---------------------------------------------------------------------------
# Pure-JAX reference (PyTorch training-mode semantics, biases included)
# ---------------------------------------------------------------------------
def fraud_detection_ref(x, params):
    h = x.astype(jnp.float32)
    for l in range(5):
        W, b, g, be = params[4 * l:4 * l + 4]
        z = h @ W.T + b
        mu = jnp.mean(z, axis=0, keepdims=True)
        var = jnp.mean((z - mu) ** 2, axis=0, keepdims=True)
        h = jnp.maximum((z - mu) / jnp.sqrt(var + BN_EPS) * g + be, 0.0)
    W6, b6 = params[20], params[21]
    return jax.nn.sigmoid(h @ W6.T + b6)


if __name__ == "__main__":
    key = jax.random.PRNGKey(0)
    k_x, k_p, k_x2 = jax.random.split(key, 3)

    input_dim = 10                      # typical |selected_features| - 1
    params = init_params(k_p, input_dim)

    # Lane-dense batch (multiple of 128): the fast path.
    x = jax.random.normal(k_x, (256, input_dim), jnp.float32)
    out = jax.block_until_ready(fraud_detection_forward(x, params))
    ref = fraud_detection_ref(x, params)
    assert out.shape == (256, 1)
    assert jnp.allclose(out, ref, atol=5e-4, rtol=5e-4), \
        float(jnp.max(jnp.abs(out - ref)))

    # Small / ragged batch: exercises lane padding + MXU-masked BN statistics.
    x2 = jax.random.normal(k_x2, (16, input_dim), jnp.float32)
    out2 = jax.block_until_ready(fraud_detection_forward(x2, params))
    ref2 = fraud_detection_ref(x2, params)
    assert out2.shape == (16, 1)
    assert jnp.allclose(out2, ref2, atol=5e-4, rtol=5e-4), \
        float(jnp.max(jnp.abs(out2 - ref2)))

    # bf16 weight path (pre-packed bf16, f32 accumulation) — looser tolerance.
    out_bf = jax.block_until_ready(
        fraud_detection_forward(x, params, use_bf16_matmul=True))
    assert out_bf.shape == (256, 1)
    assert float(jnp.max(jnp.abs(out_bf - ref))) < 5e-2

    print("KERNEL_OK")
</pallas_src>

<mosaic_0001>
module attributes {stable_mosaic.version = 11 : i64} {
  func.func @kernel(%arg0: memref<10x256xf32, #tpu.memory_space<vmem>>, %arg1: memref<384x64xf32, #tpu.memory_space<vmem>>, %arg2: memref<64x16xf32, #tpu.memory_space<vmem>>, %arg3: memref<1x256xf32, #tpu.memory_space<vmem>>) attributes {dimension_semantics = [], scalar_prefetch = 0 : i64, scratch_operands = 0 : i64, tpu.core_type = #tpu.core_type<tc>} {
    %0 = tpu.iota {dimensions = array<i32: 1>} : vector<1x256xi32>
    %c256_i32 = arith.constant 256 : i32
    %1 = vector.broadcast %c256_i32 : i32 to vector<1x256xi32>
    %2 = arith.cmpi slt, %0, %1 : vector<1x256xi32>
    %3 = arith.extui %2 : vector<1x256xi1> to vector<1x256xi32>
    %4 = arith.sitofp %3 : vector<1x256xi32> to vector<1x256xf32>
    %c0 = arith.constant 0 : index
    %c0_0 = arith.constant 0 : index
    %5 = vector.load %arg0[%c0, %c0_0] : memref<10x256xf32, #tpu.memory_space<vmem>>, vector<10x256xf32>
    %c0_1 = arith.constant 0 : index
    %c0_2 = arith.constant 0 : index
    %6 = vector.load %arg1[%c0_1, %c0_2] : memref<384x64xf32, #tpu.memory_space<vmem>>, vector<64x10xf32>
    %cst = arith.constant dense<0.000000e+00> : vector<64x256xf32>
    %7 = tpu.matmul %6, %5, %cst {dimension_numbers = #tpu.dot_dimension_numbers<[1], [0], [0], [1], [0, 0, 1, 1], [], []>} : vector<64x10xf32>, vector<10x256xf32>, vector<64x256xf32> -> vector<64x256xf32>
    %c0_3 = arith.constant 0 : index
    %c0_4 = arith.constant 0 : index
    %8 = vector.load %arg2[%c0_3, %c0_4] : memref<64x16xf32, #tpu.memory_space<vmem>>, vector<64x1xf32>
    %c0_5 = arith.constant 0 : index
    %c1 = arith.constant 1 : index
    %9 = vector.load %arg2[%c0_5, %c1] : memref<64x16xf32, #tpu.memory_space<vmem>>, vector<64x1xf32>
    %cst_6 = arith.constant dense<0.000000e+00> : vector<64x1xf32>
    %10 = tpu.matmul %7, %4, %cst_6 {dimension_numbers = #tpu.dot_dimension_numbers<[1], [1], [0], [0], [0, 0, 1, 0], [], []>} : vector<64x256xf32>, vector<1x256xf32>, vector<64x1xf32> -> vector<64x1xf32>
    %cst_7 = arith.constant 3.906250e-03 : f32
    %11 = vector.broadcast %cst_7 : f32 to vector<64x1xf32>
    %12 = arith.mulf %10, %11 : vector<64x1xf32>
    %13 = vector.broadcast %12 : vector<64x1xf32> to vector<64x256xf32>
    %14 = arith.subf %7, %13 : vector<64x256xf32>
    %15 = arith.mulf %14, %14 : vector<64x256xf32>
    %cst_8 = arith.constant dense<0.000000e+00> : vector<64x1xf32>
    %16 = tpu.matmul %15, %4, %cst_8 {dimension_numbers = #tpu.dot_dimension_numbers<[1], [1], [0], [0], [0, 0, 1, 0], [], []>} : vector<64x256xf32>, vector<1x256xf32>, vector<64x1xf32> -> vector<64x1xf32>
    %cst_9 = arith.constant 3.906250e-03 : f32
    %17 = vector.broadcast %cst_9 : f32 to vector<64x1xf32>
    %18 = arith.mulf %16, %17 : vector<64x1xf32>
    %cst_10 = arith.constant 9.99999974E-6 : f32
    %19 = vector.broadcast %cst_10 : f32 to vector<64x1xf32>
    %20 = arith.addf %18, %19 : vector<64x1xf32>
    %21 = math.rsqrt %20 : vector<64x1xf32>
    %22 = arith.mulf %8, %21 : vector<64x1xf32>
    %23 = vector.broadcast %22 : vector<64x1xf32> to vector<64x256xf32>
    %24 = arith.mulf %14, %23 : vector<64x256xf32>
    %25 = vector.broadcast %9 : vector<64x1xf32> to vector<64x256xf32>
    %26 = arith.addf %24, %25 : vector<64x256xf32>
    %cst_11 = arith.constant 0.000000e+00 : f32
    %27 = vector.broadcast %cst_11 : f32 to vector<64x256xf32>
    %28 = arith.maximumf %26, %27 : vector<64x256xf32>
    %c64 = arith.constant 64 : index
    %c0_12 = arith.constant 0 : index
    %29 = vector.load %arg1[%c64, %c0_12] : memref<384x64xf32, #tpu.memory_space<vmem>>, vector<64x64xf32>
    %cst_13 = arith.constant dense<0.000000e+00> : vector<64x256xf32>
    %30 = tpu.matmul %29, %28, %cst_13 {dimension_numbers = #tpu.dot_dimension_numbers<[1], [0], [0], [1], [0, 0, 1, 1], [], []>} : vector<64x64xf32>, vector<64x256xf32>, vector<64x256xf32> -> vector<64x256xf32>
    %c0_14 = arith.constant 0 : index
    %c2 = arith.constant 2 : index
    %31 = vector.load %arg2[%c0_14, %c2] : memref<64x16xf32, #tpu.memory_space<vmem>>, vector<64x1xf32>
    %c0_15 = arith.constant 0 : index
    %c3 = arith.constant 3 : index
    %32 = vector.load %arg2[%c0_15, %c3] : memref<64x16xf32, #tpu.memory_space<vmem>>, vector<64x1xf32>
    %cst_16 = arith.constant dense<0.000000e+00> : vector<64x1xf32>
    %33 = tpu.matmul %30, %4, %cst_16 {dimension_numbers = #tpu.dot_dimension_numbers<[1], [1], [0], [0], [0, 0, 1, 0], [], []>} : vector<64x256xf32>, vector<1x256xf32>, vector<64x1xf32> -> vector<64x1xf32>
    %cst_17 = arith.constant 3.906250e-03 : f32
    %34 = vector.broadcast %cst_17 : f32 to vector<64x1xf32>
    %35 = arith.mulf %33, %34 : vector<64x1xf32>
    %36 = vector.broadcast %35 : vector<64x1xf32> to vector<64x256xf32>
    %37 = arith.subf %30, %36 : vector<64x256xf32>
    %38 = arith.mulf %37, %37 : vector<64x256xf32>
    %cst_18 = arith.constant dense<0.000000e+00> : vector<64x1xf32>
    %39 = tpu.matmul %38, %4, %cst_18 {dimension_numbers = #tpu.dot_dimension_numbers<[1], [1], [0], [0], [0, 0, 1, 0], [], []>} : vector<64x256xf32>, vector<1x256xf32>, vector<64x1xf32> -> vector<64x1xf32>
    %cst_19 = arith.constant 3.906250e-03 : f32
    %40 = vector.broadcast %cst_19 : f32 to vector<64x1xf32>
    %41 = arith.mulf %39, %40 : vector<64x1xf32>
    %cst_20 = arith.constant 9.99999974E-6 : f32
    %42 = vector.broadcast %cst_20 : f32 to vector<64x1xf32>
    %43 = arith.addf %41, %42 : vector<64x1xf32>
    %44 = math.rsqrt %43 : vector<64x1xf32>
    %45 = arith.mulf %31, %44 : vector<64x1xf32>
    %46 = vector.broadcast %45 : vector<64x1xf32> to vector<64x256xf32>
    %47 = arith.mulf %37, %46 : vector<64x256xf32>
    %48 = vector.broadcast %32 : vector<64x1xf32> to vector<64x256xf32>
    %49 = arith.addf %47, %48 : vector<64x256xf32>
    %cst_21 = arith.constant 0.000000e+00 : f32
    %50 = vector.broadcast %cst_21 : f32 to vector<64x256xf32>
    %51 = arith.maximumf %49, %50 : vector<64x256xf32>
    %c128 = arith.constant 128 : index
    %c0_22 = arith.constant 0 : index
    %52 = vector.load %arg1[%c128, %c0_22] : memref<384x64xf32, #tpu.memory_space<vmem>>, vector<32x64xf32>
    %cst_23 = arith.constant dense<0.000000e+00> : vector<32x256xf32>
    %53 = tpu.matmul %52, %51, %cst_23 {dimension_numbers = #tpu.dot_dimension_numbers<[1], [0], [0], [1], [0, 0, 1, 1], [], []>} : vector<32x64xf32>, vector<64x256xf32>, vector<32x256xf32> -> vector<32x256xf32>
    %c0_24 = arith.constant 0 : index
    %c4 = arith.constant 4 : index
    %54 = vector.load %arg2[%c0_24, %c4] : memref<64x16xf32, #tpu.memory_space<vmem>>, vector<32x1xf32>
    %c0_25 = arith.constant 0 : index
    %c5 = arith.constant 5 : index
    %55 = vector.load %arg2[%c0_25, %c5] : memref<64x16xf32, #tpu.memory_space<vmem>>, vector<32x1xf32>
    %cst_26 = arith.constant dense<0.000000e+00> : vector<32x1xf32>
    %56 = tpu.matmul %53, %4, %cst_26 {dimension_numbers = #tpu.dot_dimension_numbers<[1], [1], [0], [0], [0, 0, 1, 0], [], []>} : vector<32x256xf32>, vector<1x256xf32>, vector<32x1xf32> -> vector<32x1xf32>
    %cst_27 = arith.constant 3.906250e-03 : f32
    %57 = vector.broadcast %cst_27 : f32 to vector<32x1xf32>
    %58 = arith.mulf %56, %57 : vector<32x1xf32>
    %59 = vector.broadcast %58 : vector<32x1xf32> to vector<32x256xf32>
    %60 = arith.subf %53, %59 : vector<32x256xf32>
    %61 = arith.mulf %60, %60 : vector<32x256xf32>
    %cst_28 = arith.constant dense<0.000000e+00> : vector<32x1xf32>
    %62 = tpu.matmul %61, %4, %cst_28 {dimension_numbers = #tpu.dot_dimension_numbers<[1], [1], [0], [0], [0, 0, 1, 0], [], []>} : vector<32x256xf32>, vector<1x256xf32>, vector<32x1xf32> -> vector<32x1xf32>
    %cst_29 = arith.constant 3.906250e-03 : f32
    %63 = vector.broadcast %cst_29 : f32 to vector<32x1xf32>
    %64 = arith.mulf %62, %63 : vector<32x1xf32>
    %cst_30 = arith.constant 9.99999974E-6 : f32
    %65 = vector.broadcast %cst_30 : f32 to vector<32x1xf32>
    %66 = arith.addf %64, %65 : vector<32x1xf32>
    %67 = math.rsqrt %66 : vector<32x1xf32>
    %68 = arith.mulf %54, %67 : vector<32x1xf32>
    %69 = vector.broadcast %68 : vector<32x1xf32> to vector<32x256xf32>
    %70 = arith.mulf %60, %69 : vector<32x256xf32>
    %71 = vector.broadcast %55 : vector<32x1xf32> to vector<32x256xf32>
    %72 = arith.addf %70, %71 : vector<32x256xf32>
    %cst_31 = arith.constant 0.000000e+00 : f32
    %73 = vector.broadcast %cst_31 : f32 to vector<32x256xf32>
    %74 = arith.maximumf %72, %73 : vector<32x256xf32>
    %c192 = arith.constant 192 : index
    %c0_32 = arith.constant 0 : index
    %75 = vector.load %arg1[%c192, %c0_32] : memref<384x64xf32, #tpu.memory_space<vmem>>, vector<32x32xf32>
    %cst_33 = arith.constant dense<0.000000e+00> : vector<32x256xf32>
    %76 = tpu.matmul %75, %74, %cst_33 {dimension_numbers = #tpu.dot_dimension_numbers<[1], [0], [0], [1], [0, 0, 1, 1], [], []>} : vector<32x32xf32>, vector<32x256xf32>, vector<32x256xf32> -> vector<32x256xf32>
    %c0_34 = arith.constant 0 : index
    %c6 = arith.constant 6 : index
    %77 = vector.load %arg2[%c0_34, %c6] : memref<64x16xf32, #tpu.memory_space<vmem>>, vector<32x1xf32>
    %c0_35 = arith.constant 0 : index
    %c7 = arith.constant 7 : index
    %78 = vector.load %arg2[%c0_35, %c7] : memref<64x16xf32, #tpu.memory_space<vmem>>, vector<32x1xf32>
    %cst_36 = arith.constant dense<0.000000e+00> : vector<32x1xf32>
    %79 = tpu.matmul %76, %4, %cst_36 {dimension_numbers = #tpu.dot_dimension_numbers<[1], [1], [0], [0], [0, 0, 1, 0], [], []>} : vector<32x256xf32>, vector<1x256xf32>, vector<32x1xf32> -> vector<32x1xf32>
    %cst_37 = arith.constant 3.906250e-03 : f32
    %80 = vector.broadcast %cst_37 : f32 to vector<32x1xf32>
    %81 = arith.mulf %79, %80 : vector<32x1xf32>
    %82 = vector.broadcast %81 : vector<32x1xf32> to vector<32x256xf32>
    %83 = arith.subf %76, %82 : vector<32x256xf32>
    %84 = arith.mulf %83, %83 : vector<32x256xf32>
    %cst_38 = arith.constant dense<0.000000e+00> : vector<32x1xf32>
    %85 = tpu.matmul %84, %4, %cst_38 {dimension_numbers = #tpu.dot_dimension_numbers<[1], [1], [0], [0], [0, 0, 1, 0], [], []>} : vector<32x256xf32>, vector<1x256xf32>, vector<32x1xf32> -> vector<32x1xf32>
    %cst_39 = arith.constant 3.906250e-03 : f32
    %86 = vector.broadcast %cst_39 : f32 to vector<32x1xf32>
    %87 = arith.mulf %85, %86 : vector<32x1xf32>
    %cst_40 = arith.constant 9.99999974E-6 : f32
    %88 = vector.broadcast %cst_40 : f32 to vector<32x1xf32>
    %89 = arith.addf %87, %88 : vector<32x1xf32>
    %90 = math.rsqrt %89 : vector<32x1xf32>
    %91 = arith.mulf %77, %90 : vector<32x1xf32>
    %92 = vector.broadcast %91 : vector<32x1xf32> to vector<32x256xf32>
    %93 = arith.mulf %83, %92 : vector<32x256xf32>
    %94 = vector.broadcast %78 : vector<32x1xf32> to vector<32x256xf32>
    %95 = arith.addf %93, %94 : vector<32x256xf32>
    %cst_41 = arith.constant 0.000000e+00 : f32
    %96 = vector.broadcast %cst_41 : f32 to vector<32x256xf32>
    %97 = arith.maximumf %95, %96 : vector<32x256xf32>
    %c256 = arith.constant 256 : index
    %c0_42 = arith.constant 0 : index
    %98 = vector.load %arg1[%c256, %c0_42] : memref<384x64xf32, #tpu.memory_space<vmem>>, vector<32x32xf32>
    %cst_43 = arith.constant dense<0.000000e+00> : vector<32x256xf32>
    %99 = tpu.matmul %98, %97, %cst_43 {dimension_numbers = #tpu.dot_dimension_numbers<[1], [0], [0], [1], [0, 0, 1, 1], [], []>} : vector<32x32xf32>, vector<32x256xf32>, vector<32x256xf32> -> vector<32x256xf32>
    %c0_44 = arith.constant 0 : index
    %c8 = arith.constant 8 : index
    %100 = vector.load %arg2[%c0_44, %c8] : memref<64x16xf32, #tpu.memory_space<vmem>>, vector<32x1xf32>
    %c0_45 = arith.constant 0 : index
    %c9 = arith.constant 9 : index
    %101 = vector.load %arg2[%c0_45, %c9] : memref<64x16xf32, #tpu.memory_space<vmem>>, vector<32x1xf32>
    %cst_46 = arith.constant dense<0.000000e+00> : vector<32x1xf32>
    %102 = tpu.matmul %99, %4, %cst_46 {dimension_numbers = #tpu.dot_dimension_numbers<[1], [1], [0], [0], [0, 0, 1, 0], [], []>} : vector<32x256xf32>, vector<1x256xf32>, vector<32x1xf32> -> vector<32x1xf32>
    %cst_47 = arith.constant 3.906250e-03 : f32
    %103 = vector.broadcast %cst_47 : f32 to vector<32x1xf32>
    %104 = arith.mulf %102, %103 : vector<32x1xf32>
    %105 = vector.broadcast %104 : vector<32x1xf32> to vector<32x256xf32>
    %106 = arith.subf %99, %105 : vector<32x256xf32>
    %107 = arith.mulf %106, %106 : vector<32x256xf32>
    %cst_48 = arith.constant dense<0.000000e+00> : vector<32x1xf32>
    %108 = tpu.matmul %107, %4, %cst_48 {dimension_numbers = #tpu.dot_dimension_numbers<[1], [1], [0], [0], [0, 0, 1, 0], [], []>} : vector<32x256xf32>, vector<1x256xf32>, vector<32x1xf32> -> vector<32x1xf32>
    %cst_49 = arith.constant 3.906250e-03 : f32
    %109 = vector.broadcast %cst_49 : f32 to vector<32x1xf32>
    %110 = arith.mulf %108, %109 : vector<32x1xf32>
    %cst_50 = arith.constant 9.99999974E-6 : f32
    %111 = vector.broadcast %cst_50 : f32 to vector<32x1xf32>
    %112 = arith.addf %110, %111 : vector<32x1xf32>
    %113 = math.rsqrt %112 : vector<32x1xf32>
    %114 = arith.mulf %100, %113 : vector<32x1xf32>
    %115 = vector.broadcast %114 : vector<32x1xf32> to vector<32x256xf32>
    %116 = arith.mulf %106, %115 : vector<32x256xf32>
    %117 = vector.broadcast %101 : vector<32x1xf32> to vector<32x256xf32>
    %118 = arith.addf %116, %117 : vector<32x256xf32>
    %cst_51 = arith.constant 0.000000e+00 : f32
    %119 = vector.broadcast %cst_51 : f32 to vector<32x256xf32>
    %120 = arith.maximumf %118, %119 : vector<32x256xf32>
    %c320 = arith.constant 320 : index
    %c0_52 = arith.constant 0 : index
    %121 = vector.load %arg1[%c320, %c0_52] : memref<384x64xf32, #tpu.memory_space<vmem>>, vector<1x32xf32>
    %cst_53 = arith.constant dense<0.000000e+00> : vector<1x256xf32>
    %122 = tpu.matmul %121, %120, %cst_53 {dimension_numbers = #tpu.dot_dimension_numbers<[1], [0], [0], [1], [0, 0, 1, 1], [], []>} : vector<1x32xf32>, vector<32x256xf32>, vector<1x256xf32> -> vector<1x256xf32>
    %c0_54 = arith.constant 0 : index
    %c10 = arith.constant 10 : index
    %123 = vector.load %arg2[%c0_54, %c10] : memref<64x16xf32, #tpu.memory_space<vmem>>, vector<1x1xf32>
    %124 = vector.broadcast %123 : vector<1x1xf32> to vector<1x256xf32>
    %125 = arith.addf %122, %124 : vector<1x256xf32>
    %cst_55 = arith.constant 0.000000e+00 : f32
    %126 = vector.broadcast %cst_55 : f32 to vector<1x256xf32>
    %127 = arith.subf %126, %125 : vector<1x256xf32>
    %128 = math.exp %127 : vector<1x256xf32>
    %cst_56 = arith.constant 1.000000e+00 : f32
    %129 = vector.broadcast %cst_56 : f32 to vector<1x256xf32>
    %130 = arith.addf %129, %128 : vector<1x256xf32>
    %cst_57 = arith.constant 1.000000e+00 : f32
    %131 = vector.broadcast %cst_57 : f32 to vector<1x256xf32>
    %132 = arith.divf %131, %130 : vector<1x256xf32>
    %c0_58 = arith.constant 0 : index
    %c0_59 = arith.constant 0 : index
    %133 = vector.load %arg3[%c0_58, %c0_59] : memref<1x256xf32, #tpu.memory_space<vmem>>, vector<1x256xf32>
    tpu.vector_store %arg3[%c0_58, %c0_59], %132 {strides = array<i32>} : memref<1x256xf32, #tpu.memory_space<vmem>>, vector<1x256xf32>,
    return
  }
}

</mosaic_0001>

<llo_original>
// kernel: tpu_custom_call.1
$region0: #{tpu_custom_call.1}
  #allocation0 [shape = 'u32[]', space=smem, size = 0x4, offset = 0x4, fixed_abs, tag = 'smem constant byte address 0x4 - core index']
  #allocation1 [shape = 'u32[144,128]{1,0:T(1,128)}', space=vmem, size = 0x12000, scoped, tag = 'internal scratch']
  %s0 = inlined_call_operand.vmem [shape: f32[10,256], index: 0, kind: input, shape index: {}]
  %s1 = inlined_call_operand.vmem [shape: f32[384,64], index: 1, kind: input, shape index: {}]
  %s2 = inlined_call_operand.vmem [shape: f32[64,16], index: 2, kind: input, shape index: {}]
  %s3 = inlined_call_operand.hbm [shape: f32[1,256], index: 3, kind: output, shape index: {}]
  %s4 = sld [smem:[#allocation0]]
  $region22: #{tpu_custom_call.1} parent=0
    _
  %s6 = ssub.s32 1, %s4
  %s7 = scalar_select 0, %s6, %s4
  $region1: #{tpu_custom_call.1} parent=0
    #allocation2 [shape = 'u8[1024]{0}', space=vmem, size = 0x400, scoped, tag = 'output window, operand 0, single buffered']
    #allocation3 [shape = 's32[1]{0}', space=sflag, size = 0x4, scoped, tag = 'scoped memory for tpu_custom_call.1']
    %8 = vsyncpa [#allocation3], 0
    // Predicated region
    $region2: #{tpu_custom_call.1} parent=1 // pred_check
      _
    $region3: #{tpu_custom_call.1} parent=1 // pred_check_branch
      %10 = sbr.rel (0) target = $region5
    $region4: #{tpu_custom_call.1} parent=1 // pred_region
      _
    $region5: #{tpu_custom_call.1} parent=1 // pred_fallthru
      _
    // Predicated region
    $region6: #{tpu_custom_call.1} parent=1 // pred_check
      _
    $region7: #{tpu_custom_call.1} parent=1 // pred_check_branch
      %12 = sbr.rel (0) target = $region9
    $region8: #{tpu_custom_call.1} parent=1 // pred_region
      _
    $region9: #{tpu_custom_call.1} parent=1 // pred_fallthru
      _
    // Predicated region
    $region10: #{tpu_custom_call.1} parent=1 // pred_check
      _
    $region11: #{tpu_custom_call.1} parent=1 // pred_check_branch
      %14 = sbr.rel (0) target = $region13
    $region12: #{tpu_custom_call.1} parent=1 // pred_region
      _
    $region13: #{tpu_custom_call.1} parent=1 // pred_fallthru
      _
    %v15 = vlaneseq
    %v16 = vand.u32 %v15, 127
    %v17 = vadd.s32 %v16, 128
    %vm18 = vcmp.lt.s32.totalorder %v16, 256
    %vm19 = vcmp.lt.s32.totalorder %v17, 256
    %v20 = vsel %vm18, 1, 0
    %v21 = vsel %vm19, 1, 0
    %v22 = vcvt.s32.f32 %v20
    %v23 = vcvt.s32.f32 %v21
    %v24 = vld [vmem:[%s0] sm:$0xff]
    %v25 = vld [vmem:[%s0 + $0x8] sm:$0xff]
    %v26 = vld [vmem:[%s0 + $0x10] sm:$0x3]
    %v27 = vld [vmem:[%s0 + $0x18] sm:$0x3]
    %v28 = vld [vmem:[%s1] sm:$0xff]
    %v29 = vld [vmem:[%s1 + $0x8] sm:$0xff]
    %v30 = vld [vmem:[%s1 + $0x10] sm:$0xff]
    %v31 = vld [vmem:[%s1 + $0x18] sm:$0xff]
    %v32 = vld [vmem:[%s1 + $0x20] sm:$0xff]
    %v33 = vld [vmem:[%s1 + $0x28] sm:$0xff]
    %v34 = vld [vmem:[%s1 + $0x30] sm:$0xff]
    %v35 = vld [vmem:[%s1 + $0x38] sm:$0xff]
    %vm36 = vcmask 80896
    %v38 = vsel %vm36, %v28, 0
    %v41 = vsel %vm36, %v29, 0
    %v44 = vsel %vm36, %v30, 0
    %v47 = vsel %vm36, %v31, 0
    %v50 = vsel %vm36, %v32, 0
    %v53 = vsel %vm36, %v33, 0
    %v56 = vsel %vm36, %v34, 0
    %v59 = vsel %vm36, %v35, 0
    %vm61 = vcmask 1041408
    %v63 = vsel %vm61, %v26, 0
    %v66 = vsel %vm61, %v27, 0
    %68 = vmatprep.subr.mxu0 %v25
    %69 = vmatpush1.msra.mxu0 %v24
    %70 = vmatprep.subr.mxu0 %v66
    %71 = vmatpush1.msra.mxu0 %v63
    %72 = vmatprep.subr.mxu0 0.0
    %73 = vmatpush1.msra.mxu0 0.0
    %74 = vmatprep.subr.mxu0 0.0
    %75 = vmatpush1.msra.mxu0 0.0
    %76 = vmatprep.subr.mxu0 0.0
    %77 = vmatpush1.msra.mxu0 0.0
    %78 = vmatprep.subr.mxu0 0.0
    %79 = vmatpush1.msra.mxu0 0.0
    %80 = vmatprep.subr.mxu0 0.0
    %81 = vmatpush1.msra.mxu0 0.0
    %82 = vmatprep.subr.mxu0 0.0
    %83 = vmatpush1.msra.mxu0 0.0
    %84 = vmatprep.subr.mxu0 0.0
    %85 = vmatpush1.msra.mxu0 0.0
    %86 = vmatprep.subr.mxu0 0.0
    %87 = vmatpush1.msra.mxu0 0.0
    %88 = vmatprep.subr.mxu0 0.0
    %89 = vmatpush1.msra.mxu0 0.0
    %90 = vmatprep.subr.mxu0 0.0
    %91 = vmatpush1.msra.mxu0 0.0
    %92 = vmatprep.subr.mxu0 0.0
    %93 = vmatpush1.msra.mxu0 0.0
    %94 = vmatprep.subr.mxu0 0.0
    %95 = vmatpush1.msra.mxu0 0.0
    %96 = vmatprep.subr.mxu0 0.0
    %97 = vmatpush1.msra.mxu0 0.0
    %98 = vmatprep.subr.mxu0 0.0
    %99 = vmatpush1.msra.mxu0 0.0
    %100 = vmatprep.subr.mxu0 0.0
    %101 = vmatpush1.msra.mxu0 0.0
    %102 = vmatprep.subr.mxu0 0.0
    %103 = vmatpush1.msra.mxu0 0.0
    %104 = vmatprep.subr.mxu0 0.0
    %105 = vmatpush1.msra.mxu0 0.0
    %106 = vmatprep.subr.mxu0 0.0
    %107 = vmatpush1.msra.mxu0 0.0
    %108 = vmatprep.subr.mxu0 0.0
    %109 = vmatpush1.msra.mxu0 0.0
    %110 = vmatprep.subr.mxu0 0.0
    %111 = vmatpush1.msra.mxu0 0.0
    %112 = vmatprep.subr.mxu0 0.0
    %113 = vmatpush1.msra.mxu0 0.0
    %114 = vmatprep.subr.mxu0 0.0
    %115 = vmatpush1.msra.mxu0 0.0
    %116 = vmatprep.subr.mxu0 0.0
    %117 = vmatpush1.msra.mxu0 0.0
    %118 = vmatprep.subr.mxu0 0.0
    %119 = vmatpush1.msra.mxu0 0.0
    %120 = vmatprep.subr.mxu0 0.0
    %121 = vmatpush1.msra.mxu0 0.0
    %122 = vmatprep.subr.mxu0 0.0
    %123 = vmatpush1.msra.mxu0 0.0
    %124 = vmatprep.subr.mxu0 0.0
    %125 = vmatpush1.msra.mxu0 0.0
    %126 = vmatprep.subr.mxu0 0.0
    %127 = vmatpush1.msra.mxu0 0.0
    %128 = vmatprep.subr.mxu0 0.0
    %129 = vmatpush1.msra.mxu0 0.0
    %130 = vmatprep.subr.mxu0 0.0
    %131 = vmatpush1.msra.mxu0 0.0
    %132 = vmatprep.mubr.f32.mxu0 0.0
    %133 = vmatmul.mubr.f32.gmra.mrb[0].mxu0 %v38
    %v134 = vpop.f32.mrb[0].mxu0
    %v135 = vadd.f32 0.0, %v134
    %v136 = vpop.f32.mrb[0].mxu0
    %v137 = vadd.f32 0.0, %v136
    %138 = vmatprep.mubr.f32.mxu0 0.0
    %139 = vmatmul.mubr.f32.gmra.mrb[0].mxu0 %v41
    %v140 = vpop.f32.mrb[0].mxu0
    %v141 = vadd.f32 0.0, %v140
    %v142 = vpop.f32.mrb[0].mxu0
    %v143 = vadd.f32 0.0, %v142
    %144 = vmatprep.mubr.f32.mxu0 0.0
    %145 = vmatmul.mubr.f32.gmra.mrb[0].mxu0 %v44
    %v146 = vpop.f32.mrb[0].mxu0
    %v147 = vadd.f32 0.0, %v146
    %v148 = vpop.f32.mrb[0].mxu0
    %v149 = vadd.f32 0.0, %v148
    %150 = vmatprep.mubr.f32.mxu0 0.0
    %151 = vmatmul.mubr.f32.gmra.mrb[0].mxu0 %v47
    %v152 = vpop.f32.mrb[0].mxu0
    %v153 = vadd.f32 0.0, %v152
    %v154 = vpop.f32.mrb[0].mxu0
    %v155 = vadd.f32 0.0, %v154
    %156 = vmatprep.mubr.f32.mxu0 0.0
    %157 = vmatmul.mubr.f32.gmra.mrb[0].mxu0 %v50
    %v158 = vpop.f32.mrb[0].mxu0
    %v159 = vadd.f32 0.0, %v158
    %v160 = vpop.f32.mrb[0].mxu0
    %v161 = vadd.f32 0.0, %v160
    %162 = vmatprep.mubr.f32.mxu0 0.0
    %163 = vmatmul.mubr.f32.gmra.mrb[0].mxu0 %v53
    %v164 = vpop.f32.mrb[0].mxu0
    %v165 = vadd.f32 0.0, %v164
    %v166 = vpop.f32.mrb[0].mxu0
    %v167 = vadd.f32 0.0, %v166
    %168 = vmatprep.mubr.f32.mxu0 0.0
    %169 = vmatmul.mubr.f32.gmra.mrb[0].mxu0 %v56
    %v170 = vpop.f32.mrb[0].mxu0
    %v171 = vadd.f32 0.0, %v170
    %v172 = vpop.f32.mrb[0].mxu0
    %v173 = vadd.f32 0.0, %v172
    %174 = vmatprep.mubr.f32.mxu0 0.0
    %175 = vmatmul.mubr.f32.gmra.mrb[0].mxu0 %v59
    %v176 = vpop.f32.mrb[0].mxu0
    %v177 = vadd.f32 0.0, %v176
    %v178 = vpop.f32.mrb[0].mxu0
    %v179 = vadd.f32 0.0, %v178
    %180 = vdwg.mxu0
    %v181 = vld [vmem:[%s2] sm:$0xff]
    %v182 = vld [vmem:[%s2 + $0x8] sm:$0xff]
    %v183 = vld [vmem:[%s2 + $0x10] sm:$0xff]
    %v184 = vld [vmem:[%s2 + $0x18] sm:$0xff]
    %v185 = vld [vmem:[%s2 + $0x20] sm:$0xff]
    %v186 = vld [vmem:[%s2 + $0x28] sm:$0xff]
    %v187 = vld [vmem:[%s2 + $0x30] sm:$0xff]
    %v188 = vld [vmem:[%s2 + $0x38] sm:$0xff]
    %v189 = vmul.f32 %v135, %v22
    %v190 = vmul.f32 %v137, %v23
    %v191 = vmul.f32 %v141, %v22
    %v192 = vmul.f32 %v143, %v23
    %v193 = vmul.f32 %v147, %v22
    %v194 = vmul.f32 %v149, %v23
    %v195 = vmul.f32 %v153, %v22
    %v196 = vmul.f32 %v155, %v23
    %v197 = vmul.f32 %v159, %v22
    %v198 = vmul.f32 %v161, %v23
    %v199 = vmul.f32 %v165, %v22
    %v200 = vmul.f32 %v167, %v23
    %v201 = vmul.f32 %v171, %v22
    %v202 = vmul.f32 %v173, %v23
    %v203 = vmul.f32 %v177, %v22
    %v204 = vmul.f32 %v179, %v23
    %v205 = vadd.f32 %v189, %v190
    %206 = vadd.xlane.f32.xlu0 %v205
    %v207 = vpop.xlane.xlu0 %206
    %v208 = vadd.f32 %v191, %v192
    %209 = vadd.xlane.f32.xlu0 %v208
    %v210 = vpop.xlane.xlu0 %209
    %v211 = vadd.f32 %v193, %v194
    %212 = vadd.xlane.f32.xlu0 %v211
    %v213 = vpop.xlane.xlu0 %212
    %v214 = vadd.f32 %v195, %v196
    %215 = vadd.xlane.f32.xlu0 %v214
    %v216 = vpop.xlane.xlu0 %215
    %v217 = vadd.f32 %v197, %v198
    %218 = vadd.xlane.f32.xlu0 %v217
    %v219 = vpop.xlane.xlu0 %218
    %v220 = vadd.f32 %v199, %v200
    %221 = vadd.xlane.f32.xlu0 %v220
    %v222 = vpop.xlane.xlu0 %221
    %v223 = vadd.f32 %v201, %v202
    %224 = vadd.xlane.f32.xlu0 %v223
    %v225 = vpop.xlane.xlu0 %224
    %v226 = vadd.f32 %v203, %v204
    %227 = vadd.xlane.f32.xlu0 %v226
    %v228 = vpop.xlane.xlu0 %227
    %v229 = vmul.f32 %v207, 0.00390625
    %v230 = vmul.f32 %v210, 0.00390625
    %v231 = vmul.f32 %v213, 0.00390625
    %v232 = vmul.f32 %v216, 0.00390625
    %v233 = vmul.f32 %v219, 0.00390625
    %v234 = vmul.f32 %v222, 0.00390625
    %v235 = vmul.f32 %v225, 0.00390625
    %v236 = vmul.f32 %v228, 0.00390625
    %v237 = vsub.f32 %v135, %v229
    %v238 = vsub.f32 %v137, %v229
    %v239 = vsub.f32 %v141, %v230
    %v240 = vsub.f32 %v143, %v230
    %v241 = vsub.f32 %v147, %v231
    %v242 = vsub.f32 %v149, %v231
    %v243 = vsub.f32 %v153, %v232
    %v244 = vsub.f32 %v155, %v232
    %v245 = vsub.f32 %v159, %v233
    %v246 = vsub.f32 %v161, %v233
    %v247 = vsub.f32 %v165, %v234
    %v248 = vsub.f32 %v167, %v234
    %v249 = vsub.f32 %v171, %v235
    %v250 = vsub.f32 %v173, %v235
    %v251 = vsub.f32 %v177, %v236
    %v252 = vsub.f32 %v179, %v236
    %v253 = vmul.f32 %v237, %v237
    %v254 = vmul.f32 %v238, %v238
    %v255 = vmul.f32 %v239, %v239
    %v256 = vmul.f32 %v240, %v240
    %v257 = vmul.f32 %v241, %v241
    %v258 = vmul.f32 %v242, %v242
    %v259 = vmul.f32 %v243, %v243
    %v260 = vmul.f32 %v244, %v244
    %v261 = vmul.f32 %v245, %v245
    %v262 = vmul.f32 %v246, %v246
    %v263 = vmul.f32 %v247, %v247
    %v264 = vmul.f32 %v248, %v248
    %v265 = vmul.f32 %v249, %v249
    %v266 = vmul.f32 %v250, %v250
    %v267 = vmul.f32 %v251, %v251
    %v268 = vmul.f32 %v252, %v252
    %v269 = vmul.f32 %v253, %v22
    %v270 = vmul.f32 %v254, %v23
    %v271 = vmul.f32 %v255, %v22
    %v272 = vmul.f32 %v256, %v23
    %v273 = vmul.f32 %v257, %v22
    %v274 = vmul.f32 %v258, %v23
    %v275 = vmul.f32 %v259, %v22
    %v276 = vmul.f32 %v260, %v23
    %v277 = vmul.f32 %v261, %v22
    %v278 = vmul.f32 %v262, %v23
    %v279 = vmul.f32 %v263, %v22
    %v280 = vmul.f32 %v264, %v23
    %v281 = vmul.f32 %v265, %v22
    %v282 = vmul.f32 %v266, %v23
    %v283 = vmul.f32 %v267, %v22
    %v284 = vmul.f32 %v268, %v23
    %v285 = vadd.f32 %v269, %v270
    %286 = vadd.xlane.f32.xlu0 %v285
    %v287 = vpop.xlane.xlu0 %286
    %v288 = vadd.f32 %v271, %v272
    %289 = vadd.xlane.f32.xlu0 %v288
    %v290 = vpop.xlane.xlu0 %289
    %v291 = vadd.f32 %v273, %v274
    %292 = vadd.xlane.f32.xlu0 %v291
    %v293 = vpop.xlane.xlu0 %292
    %v294 = vadd.f32 %v275, %v276
    %295 = vadd.xlane.f32.xlu0 %v294
    %v296 = vpop.xlane.xlu0 %295
    %v297 = vadd.f32 %v277, %v278
    %298 = vadd.xlane.f32.xlu0 %v297
    %v299 = vpop.xlane.xlu0 %298
    %v300 = vadd.f32 %v279, %v280
    %301 = vadd.xlane.f32.xlu0 %v300
    %v302 = vpop.xlane.xlu0 %301
    %v303 = vadd.f32 %v281, %v282
    %304 = vadd.xlane.f32.xlu0 %v303
    %v305 = vpop.xlane.xlu0 %304
    %v306 = vadd.f32 %v283, %v284
    %307 = vadd.xlane.f32.xlu0 %v306
    %v308 = vpop.xlane.xlu0 %307
    %v309 = vmul.f32 %v287, 0.00390625
    %v310 = vmul.f32 %v290, 0.00390625
    %v311 = vmul.f32 %v293, 0.00390625
    %v312 = vmul.f32 %v296, 0.00390625
    %v313 = vmul.f32 %v299, 0.00390625
    %v314 = vmul.f32 %v302, 0.00390625
    %v315 = vmul.f32 %v305, 0.00390625
    %v316 = vmul.f32 %v308, 0.00390625
    %v317 = vadd.f32 %v309, 1e-05
    %v318 = vadd.f32 %v310, 1e-05
    %v319 = vadd.f32 %v311, 1e-05
    %v320 = vadd.f32 %v312, 1e-05
    %v321 = vadd.f32 %v313, 1e-05
    %v322 = vadd.f32 %v314, 1e-05
    %v323 = vadd.f32 %v315, 1e-05
    %v324 = vadd.f32 %v316, 1e-05
    %v325 = vrsqrt.pop %v317
    %v326 = vrsqrt.pop %v318
    %v327 = vrsqrt.pop %v319
    %v328 = vrsqrt.pop %v320
    %v329 = vrsqrt.pop %v321
    %v330 = vrsqrt.pop %v322
    %v331 = vrsqrt.pop %v323
    %v332 = vrsqrt.pop %v324
    %v333 = vmul.f32 %v181, %v325
    %v334 = vmul.f32 %v182, %v326
    %v335 = vmul.f32 %v183, %v327
    %v336 = vmul.f32 %v184, %v328
    %v337 = vmul.f32 %v185, %v329
    %v338 = vmul.f32 %v186, %v330
    %v339 = vmul.f32 %v187, %v331
    %v340 = vmul.f32 %v188, %v332
    %342 = vset.pattern.permute.xlu0 0
    %343 = vperm.xlu0 %342, %v333
    %v344 = vpop.permute.xlu0 %343
    %347 = vset.pattern.permute.xlu0 0
    %348 = vperm.xlu0 %347, %v334
    %v349 = vpop.permute.xlu0 %348
    %352 = vset.pattern.permute.xlu0 0
    %353 = vperm.xlu0 %352, %v335
    %v354 = vpop.permute.xlu0 %353
    %357 = vset.pattern.permute.xlu0 0
    %358 = vperm.xlu0 %357, %v336
    %v359 = vpop.permute.xlu0 %358
    %362 = vset.pattern.permute.xlu0 0
    %363 = vperm.xlu0 %362, %v337
    %v364 = vpop.permute.xlu0 %363
    %367 = vset.pattern.permute.xlu0 0
    %368 = vperm.xlu0 %367, %v338
    %v369 = vpop.permute.xlu0 %368
    %372 = vset.pattern.permute.xlu0 0
    %373 = vperm.xlu0 %372, %v339
    %v374 = vpop.permute.xlu0 %373
    %377 = vset.pattern.permute.xlu0 0
    %378 = vperm.xlu0 %377, %v340
    %v379 = vpop.permute.xlu0 %378
    %v381 = vmul.f32 %v237, %v344
    %v382 = vmul.f32 %v238, %v344
    %v383 = vmul.f32 %v239, %v349
    %v384 = vmul.f32 %v240, %v349
    %v385 = vmul.f32 %v241, %v354
    %v386 = vmul.f32 %v242, %v354
    %v387 = vmul.f32 %v243, %v359
    %v388 = vmul.f32 %v244, %v359
    %v389 = vmul.f32 %v245, %v364
    %v390 = vmul.f32 %v246, %v364
    %v391 = vmul.f32 %v247, %v369
    %v392 = vmul.f32 %v248, %v369
    %v393 = vmul.f32 %v249, %v374
    %v394 = vmul.f32 %v250, %v374
    %v395 = vmul.f32 %v251, %v379
    %v396 = vmul.f32 %v252, %v379
    %398 = vset.pattern.permute.xlu0 1
    %399 = vperm.xlu0 %398, %v181
    %v400 = vpop.permute.xlu0 %399
    %403 = vset.pattern.permute.xlu0 1
    %404 = vperm.xlu0 %403, %v182
    %v405 = vpop.permute.xlu0 %404
    %408 = vset.pattern.permute.xlu0 1
    %409 = vperm.xlu0 %408, %v183
    %v410 = vpop.permute.xlu0 %409
    %413 = vset.pattern.permute.xlu0 1
    %414 = vperm.xlu0 %413, %v184
    %v415 = vpop.permute.xlu0 %414
    %418 = vset.pattern.permute.xlu0 1
    %419 = vperm.xlu0 %418, %v185
    %v420 = vpop.permute.xlu0 %419
    %423 = vset.pattern.permute.xlu0 1
    %424 = vperm.xlu0 %423, %v186
    %v425 = vpop.permute.xlu0 %424
    %428 = vset.pattern.permute.xlu0 1
    %429 = vperm.xlu0 %428, %v187
    %v430 = vpop.permute.xlu0 %429
    %433 = vset.pattern.permute.xlu0 1
    %434 = vperm.xlu0 %433, %v188
    %v435 = vpop.permute.xlu0 %434
    %v437 = vadd.f32 %v381, %v400
    %v438 = vadd.f32 %v382, %v400
    %v439 = vadd.f32 %v383, %v405
    %v440 = vadd.f32 %v384, %v405
    %v441 = vadd.f32 %v385, %v410
    %v442 = vadd.f32 %v386, %v410
    %v443 = vadd.f32 %v387, %v415
    %v444 = vadd.f32 %v388, %v415
    %v445 = vadd.f32 %v389, %v420
    %v446 = vadd.f32 %v390, %v420
    %v447 = vadd.f32 %v391, %v425
    %v448 = vadd.f32 %v392, %v425
    %v449 = vadd.f32 %v393, %v430
    %v450 = vadd.f32 %v394, %v430
    %v451 = vadd.f32 %v395, %v435
    %v452 = vadd.f32 %v396, %v435
    %v453 = vmax.f32 %v437, 0.0
    %v454 = vmax.f32 %v438, 0.0
    %v455 = vmax.f32 %v439, 0.0
    %v456 = vmax.f32 %v440, 0.0
    %v457 = vmax.f32 %v441, 0.0
    %v458 = vmax.f32 %v442, 0.0
    %v459 = vmax.f32 %v443, 0.0
    %v460 = vmax.f32 %v444, 0.0
    %v461 = vmax.f32 %v445, 0.0
    %v462 = vmax.f32 %v446, 0.0
    %v463 = vmax.f32 %v447, 0.0
    %v464 = vmax.f32 %v448, 0.0
    %v465 = vmax.f32 %v449, 0.0
    %v466 = vmax.f32 %v450, 0.0
    %v467 = vmax.f32 %v451, 0.0
    %v468 = vmax.f32 %v452, 0.0
    %v469 = vld [vmem:[%s1 + $0x40] sm:$0xff]
    %v470 = vld [vmem:[%s1 + $0x48] sm:$0xff]
    %v471 = vld [vmem:[%s1 + $0x50] sm:$0xff]
    %v472 = vld [vmem:[%s1 + $0x58] sm:$0xff]
    %v473 = vld [vmem:[%s1 + $0x60] sm:$0xff]
    %v474 = vld [vmem:[%s1 + $0x68] sm:$0xff]
    %v475 = vld [vmem:[%s1 + $0x70] sm:$0xff]
    %v476 = vld [vmem:[%s1 + $0x78] sm:$0xff]
    %vm477 = vcmask 523264
    %v479 = vsel %vm477, %v469, 0
    %v482 = vsel %vm477, %v470, 0
    %v485 = vsel %vm477, %v471, 0
    %v488 = vsel %vm477, %v472, 0
    %v491 = vsel %vm477, %v473, 0
    %v494 = vsel %vm477, %v474, 0
    %v497 = vsel %vm477, %v475, 0
    %v500 = vsel %vm477, %v476, 0
    %502 = vmatprep.subr.mxu0 %v454
    %503 = vmatpush1.msra.mxu0 %v453
    %504 = vmatprep.subr.mxu0 %v456
    %505 = vmatpush1.msra.mxu0 %v455
    %506 = vmatprep.subr.mxu0 %v458
    %507 = vmatpush1.msra.mxu0 %v457
    %508 = vmatprep.subr.mxu0 %v460
    %509 = vmatpush1.msra.mxu0 %v459
    %510 = vmatprep.subr.mxu0 %v462
    %511 = vmatpush1.msra.mxu0 %v461
    %512 = vmatprep.subr.mxu0 %v464
    %513 = vmatpush1.msra.mxu0 %v463
    %514 = vmatprep.subr.mxu0 %v466
    %515 = vmatpush1.msra.mxu0 %v465
    %516 = vmatprep.subr.mxu0 %v468
    %517 = vmatpush1.msra.mxu0 %v467
    %518 = vmatprep.subr.mxu0 0.0
    %519 = vmatpush1.msra.mxu0 0.0
    %520 = vmatprep.subr.mxu0 0.0
    %521 = vmatpush1.msra.mxu0 0.0
    %522 = vmatprep.subr.mxu0 0.0
    %523 = vmatpush1.msra.mxu0 0.0
    %524 = vmatprep.subr.mxu0 0.0
    %525 = vmatpush1.msra.mxu0 0.0
    %526 = vmatprep.subr.mxu0 0.0
    %527 = vmatpush1.msra.mxu0 0.0
    %528 = vmatprep.subr.mxu0 0.0
    %529 = vmatpush1.msra.mxu0 0.0
    %530 = vmatprep.subr.mxu0 0.0
    %531 = vmatpush1.msra.mxu0 0.0
    %532 = vmatprep.subr.mxu0 0.0
    %533 = vmatpush1.msra.mxu0 0.0
    %534 = vmatprep.subr.mxu0 0.0
    %535 = vmatpush1.msra.mxu0 0.0
    %536 = vmatprep.subr.mxu0 0.0
    %537 = vmatpush1.msra.mxu0 0.0
    %538 = vmatprep.subr.mxu0 0.0
    %539 = vmatpush1.msra.mxu0 0.0
    %540 = vmatprep.subr.mxu0 0.0
    %541 = vmatpush1.msra.mxu0 0.0
    %542 = vmatprep.subr.mxu0 0.0
    %543 = vmatpush1.msra.mxu0 0.0
    %544 = vmatprep.subr.mxu0 0.0
    %545 = vmatpush1.msra.mxu0 0.0
    %546 = vmatprep.subr.mxu0 0.0
    %547 = vmatpush1.msra.mxu0 0.0
    %548 = vmatprep.subr.mxu0 0.0
    %549 = vmatpush1.msra.mxu0 0.0
    %550 = vmatprep.subr.mxu0 0.0
    %551 = vmatpush1.msra.mxu0 0.0
    %552 = vmatprep.subr.mxu0 0.0
    %553 = vmatpush1.msra.mxu0 0.0
    %554 = vmatprep.subr.mxu0 0.0
    %555 = vmatpush1.msra.mxu0 0.0
    %556 = vmatprep.subr.mxu0 0.0
    %557 = vmatpush1.msra.mxu0 0.0
    %558 = vmatprep.subr.mxu0 0.0
    %559 = vmatpush1.msra.mxu0 0.0
    %560 = vmatprep.subr.mxu0 0.0
    %561 = vmatpush1.msra.mxu0 0.0
    %562 = vmatprep.subr.mxu0 0.0
    %563 = vmatpush1.msra.mxu0 0.0
    %564 = vmatprep.subr.mxu0 0.0
    %565 = vmatpush1.msra.mxu0 0.0
    %566 = vmatprep.mubr.f32.mxu0 0.0
    %567 = vmatmul.mubr.f32.gmra.mrb[0].mxu0 %v479
    %v568 = vpop.f32.mrb[0].mxu0
    %v569 = vadd.f32 0.0, %v568
    %v570 = vpop.f32.mrb[0].mxu0
    %v571 = vadd.f32 0.0, %v570
    %572 = vmatprep.mubr.f32.mxu0 0.0
    %573 = vmatmul.mubr.f32.gmra.mrb[0].mxu0 %v482
    %v574 = vpop.f32.mrb[0].mxu0
    %v575 = vadd.f32 0.0, %v574
    %v576 = vpop.f32.mrb[0].mxu0
    %v577 = vadd.f32 0.0, %v576
    %578 = vmatprep.mubr.f32.mxu0 0.0
    %579 = vmatmul.mubr.f32.gmra.mrb[0].mxu0 %v485
    %v580 = vpop.f32.mrb[0].mxu0
    %v581 = vadd.f32 0.0, %v580
    %v582 = vpop.f32.mrb[0].mxu0
    %v583 = vadd.f32 0.0, %v582
    %584 = vmatprep.mubr.f32.mxu0 0.0
    %585 = vmatmul.mubr.f32.gmra.mrb[0].mxu0 %v488
    %v586 = vpop.f32.mrb[0].mxu0
    %v587 = vadd.f32 0.0, %v586
    %v588 = vpop.f32.mrb[0].mxu0
    %v589 = vadd.f32 0.0, %v588
    %590 = vmatprep.mubr.f32.mxu0 0.0
    %591 = vmatmul.mubr.f32.gmra.mrb[0].mxu0 %v491
    %v592 = vpop.f32.mrb[0].mxu0
    %v593 = vadd.f32 0.0, %v592
    %v594 = vpop.f32.mrb[0].mxu0
    %v595 = vadd.f32 0.0, %v594
    %596 = vmatprep.mubr.f32.mxu0 0.0
    %597 = vmatmul.mubr.f32.gmra.mrb[0].mxu0 %v494
    %v598 = vpop.f32.mrb[0].mxu0
    %v599 = vadd.f32 0.0, %v598
    %v600 = vpop.f32.mrb[0].mxu0
    %v601 = vadd.f32 0.0, %v600
    %602 = vmatprep.mubr.f32.mxu0 0.0
    %603 = vmatmul.mubr.f32.gmra.mrb[0].mxu0 %v497
    %v604 = vpop.f32.mrb[0].mxu0
    %v605 = vadd.f32 0.0, %v604
    %v606 = vpop.f32.mrb[0].mxu0
    %v607 = vadd.f32 0.0, %v606
    %608 = vmatprep.mubr.f32.mxu0 0.0
    %609 = vmatmul.mubr.f32.gmra.mrb[0].mxu0 %v500
    %v610 = vpop.f32.mrb[0].mxu0
    %v611 = vadd.f32 0.0, %v610
    %v612 = vpop.f32.mrb[0].mxu0
    %v613 = vadd.f32 0.0, %v612
    %614 = vdwg.mxu0
    %v615 = vmul.f32 %v569, %v22
    %v616 = vmul.f32 %v571, %v23
    %v617 = vmul.f32 %v575, %v22
    %v618 = vmul.f32 %v577, %v23
    %v619 = vmul.f32 %v581, %v22
    %v620 = vmul.f32 %v583, %v23
    %v621 = vmul.f32 %v587, %v22
    %v622 = vmul.f32 %v589, %v23
    %v623 = vmul.f32 %v593, %v22
    %v624 = vmul.f32 %v595, %v23
    %v625 = vmul.f32 %v599, %v22
    %v626 = vmul.f32 %v601, %v23
    %v627 = vmul.f32 %v605, %v22
    %v628 = vmul.f32 %v607, %v23
    %v629 = vmul.f32 %v611, %v22
    %v630 = vmul.f32 %v613, %v23
    %v631 = vadd.f32 %v615, %v616
    %632 = vadd.xlane.f32.xlu0 %v631
    %v633 = vpop.xlane.xlu0 %632
    %v634 = vadd.f32 %v617, %v618
    %635 = vadd.xlane.f32.xlu0 %v634
    %v636 = vpop.xlane.xlu0 %635
    %v637 = vadd.f32 %v619, %v620
    %638 = vadd.xlane.f32.xlu0 %v637
    %v639 = vpop.xlane.xlu0 %638
    %v640 = vadd.f32 %v621, %v622
    %641 = vadd.xlane.f32.xlu0 %v640
    %v642 = vpop.xlane.xlu0 %641
    %v643 = vadd.f32 %v623, %v624
    %644 = vadd.xlane.f32.xlu0 %v643
    %v645 = vpop.xlane.xlu0 %644
    %v646 = vadd.f32 %v625, %v626
    %647 = vadd.xlane.f32.xlu0 %v646
    %v648 = vpop.xlane.xlu0 %647
    %v649 = vadd.f32 %v627, %v628
    %650 = vadd.xlane.f32.xlu0 %v649
    %v651 = vpop.xlane.xlu0 %650
    %v652 = vadd.f32 %v629, %v630
    %653 = vadd.xlane.f32.xlu0 %v652
    %v654 = vpop.xlane.xlu0 %653
    %v655 = vmul.f32 %v633, 0.00390625
    %v656 = vmul.f32 %v636, 0.00390625
    %v657 = vmul.f32 %v639, 0.00390625
    %v658 = vmul.f32 %v642, 0.00390625
    %v659 = vmul.f32 %v645, 0.00390625
    %v660 = vmul.f32 %v648, 0.00390625
    %v661 = vmul.f32 %v651, 0.00390625
    %v662 = vmul.f32 %v654, 0.00390625
    %v663 = vsub.f32 %v569, %v655
    %v664 = vsub.f32 %v571, %v655
    %v665 = vsub.f32 %v575, %v656
    %v666 = vsub.f32 %v577, %v656
    %v667 = vsub.f32 %v581, %v657
    %v668 = vsub.f32 %v583, %v657
    %v669 = vsub.f32 %v587, %v658
    %v670 = vsub.f32 %v589, %v658
    %v671 = vsub.f32 %v593, %v659
    %v672 = vsub.f32 %v595, %v659
    %v673 = vsub.f32 %v599, %v660
    %v674 = vsub.f32 %v601, %v660
    %v675 = vsub.f32 %v605, %v661
    %v676 = vsub.f32 %v607, %v661
    %v677 = vsub.f32 %v611, %v662
    %v678 = vsub.f32 %v613, %v662
    %v679 = vmul.f32 %v663, %v663
    %v680 = vmul.f32 %v664, %v664
    %v681 = vmul.f32 %v665, %v665
    %v682 = vmul.f32 %v666, %v666
    %v683 = vmul.f32 %v667, %v667
    %v684 = vmul.f32 %v668, %v668
    %v685 = vmul.f32 %v669, %v669
    %v686 = vmul.f32 %v670, %v670
    %v687 = vmul.f32 %v671, %v671
    %v688 = vmul.f32 %v672, %v672
    %v689 = vmul.f32 %v673, %v673
    %v690 = vmul.f32 %v674, %v674
    %v691 = vmul.f32 %v675, %v675
    %v692 = vmul.f32 %v676, %v676
    %v693 = vmul.f32 %v677, %v677
    %v694 = vmul.f32 %v678, %v678
    %v695 = vmul.f32 %v679, %v22
    %v696 = vmul.f32 %v680, %v23
    %v697 = vmul.f32 %v681, %v22
    %v698 = vmul.f32 %v682, %v23
    %v699 = vmul.f32 %v683, %v22
    %v700 = vmul.f32 %v684, %v23
    %v701 = vmul.f32 %v685, %v22
    %v702 = vmul.f32 %v686, %v23
    %v703 = vmul.f32 %v687, %v22
    %v704 = vmul.f32 %v688, %v23
    %v705 = vmul.f32 %v689, %v22
    %v706 = vmul.f32 %v690, %v23
    %v707 = vmul.f32 %v691, %v22
    %v708 = vmul.f32 %v692, %v23
    %v709 = vmul.f32 %v693, %v22
    %v710 = vmul.f32 %v694, %v23
    %v711 = vadd.f32 %v695, %v696
    %712 = vadd.xlane.f32.xlu0 %v711
    %v713 = vpop.xlane.xlu0 %712
    %v714 = vadd.f32 %v697, %v698
    %715 = vadd.xlane.f32.xlu0 %v714
    %v716 = vpop.xlane.xlu0 %715
    %v717 = vadd.f32 %v699, %v700
    %718 = vadd.xlane.f32.xlu0 %v717
    %v719 = vpop.xlane.xlu0 %718
    %v720 = vadd.f32 %v701, %v702
    %721 = vadd.xlane.f32.xlu0 %v720
    %v722 = vpop.xlane.xlu0 %721
    %v723 = vadd.f32 %v703, %v704
    %724 = vadd.xlane.f32.xlu0 %v723
    %v725 = vpop.xlane.xlu0 %724
    %v726 = vadd.f32 %v705, %v706
    %727 = vadd.xlane.f32.xlu0 %v726
    %v728 = vpop.xlane.xlu0 %727
    %v729 = vadd.f32 %v707, %v708
    %730 = vadd.xlane.f32.xlu0 %v729
    %v731 = vpop.xlane.xlu0 %730
    %v732 = vadd.f32 %v709, %v710
    %733 = vadd.xlane.f32.xlu0 %v732
    %v734 = vpop.xlane.xlu0 %733
    %v735 = vmul.f32 %v713, 0.00390625
    %v736 = vmul.f32 %v716, 0.00390625
    %v737 = vmul.f32 %v719, 0.00390625
    %v738 = vmul.f32 %v722, 0.00390625
    %v739 = vmul.f32 %v725, 0.00390625
    %v740 = vmul.f32 %v728, 0.00390625
    %v741 = vmul.f32 %v731, 0.00390625
    %v742 = vmul.f32 %v734, 0.00390625
    %v743 = vadd.f32 %v735, 1e-05
    %v744 = vadd.f32 %v736, 1e-05
    %v745 = vadd.f32 %v737, 1e-05
    %v746 = vadd.f32 %v738, 1e-05
    %v747 = vadd.f32 %v739, 1e-05
    %v748 = vadd.f32 %v740, 1e-05
    %v749 = vadd.f32 %v741, 1e-05
    %v750 = vadd.f32 %v742, 1e-05
    %v751 = vrsqrt.pop %v743
    %v752 = vrsqrt.pop %v744
    %v753 = vrsqrt.pop %v745
    %v754 = vrsqrt.pop %v746
    %v755 = vrsqrt.pop %v747
    %v756 = vrsqrt.pop %v748
    %v757 = vrsqrt.pop %v749
    %v758 = vrsqrt.pop %v750
    %v759 = vmul.f32 %v181, %v751
    %v760 = vmul.f32 %v182, %v752
    %v761 = vmul.f32 %v183, %v753
    %v762 = vmul.f32 %v184, %v754
    %v763 = vmul.f32 %v185, %v755
    %v764 = vmul.f32 %v186, %v756
    %v765 = vmul.f32 %v187, %v757
    %v766 = vmul.f32 %v188, %v758
    %768 = vset.pattern.permute.xlu0 2
    %769 = vperm.xlu0 %768, %v759
    %v770 = vpop.permute.xlu0 %769
    %773 = vset.pattern.permute.xlu0 2
    %774 = vperm.xlu0 %773, %v760
    %v775 = vpop.permute.xlu0 %774
    %778 = vset.pattern.permute.xlu0 2
    %779 = vperm.xlu0 %778, %v761
    %v780 = vpop.permute.xlu0 %779
    %783 = vset.pattern.permute.xlu0 2
    %784 = vperm.xlu0 %783, %v762
    %v785 = vpop.permute.xlu0 %784
    %788 = vset.pattern.permute.xlu0 2
    %789 = vperm.xlu0 %788, %v763
    %v790 = vpop.permute.xlu0 %789
    %793 = vset.pattern.permute.xlu0 2
    %794 = vperm.xlu0 %793, %v764
    %v795 = vpop.permute.xlu0 %794
    %798 = vset.pattern.permute.xlu0 2
    %799 = vperm.xlu0 %798, %v765
    %v800 = vpop.permute.xlu0 %799
    %803 = vset.pattern.permute.xlu0 2
    %804 = vperm.xlu0 %803, %v766
    %v805 = vpop.permute.xlu0 %804
    %v807 = vmul.f32 %v663, %v770
    %v808 = vmul.f32 %v664, %v770
    %v809 = vmul.f32 %v665, %v775
    %v810 = vmul.f32 %v666, %v775
    %v811 = vmul.f32 %v667, %v780
    %v812 = vmul.f32 %v668, %v780
    %v813 = vmul.f32 %v669, %v785
    %v814 = vmul.f32 %v670, %v785
    %v815 = vmul.f32 %v671, %v790
    %v816 = vmul.f32 %v672, %v790
    %v817 = vmul.f32 %v673, %v795
    %v818 = vmul.f32 %v674, %v795
    %v819 = vmul.f32 %v675, %v800
    %v820 = vmul.f32 %v676, %v800
    %v821 = vmul.f32 %v677, %v805
    %v822 = vmul.f32 %v678, %v805
    %823 = vset.pattern.permute.xlu0 3
    %824 = vperm.xlu0 %823, %v181
    %v825 = vpop.permute.xlu0 %824
    %827 = vset.pattern.permute.xlu0 3
    %828 = vperm.xlu0 %827, %v182
    %v829 = vpop.permute.xlu0 %828
    %831 = vset.pattern.permute.xlu0 3
    %832 = vperm.xlu0 %831, %v183
    %v833 = vpop.permute.xlu0 %832
    %835 = vset.pattern.permute.xlu0 3
    %836 = vperm.xlu0 %835, %v184
    %v837 = vpop.permute.xlu0 %836
    %839 = vset.pattern.permute.xlu0 3
    %840 = vperm.xlu0 %839, %v185
    %v841 = vpop.permute.xlu0 %840
    %843 = vset.pattern.permute.xlu0 3
    %844 = vperm.xlu0 %843, %v186
    %v845 = vpop.permute.xlu0 %844
    %847 = vset.pattern.permute.xlu0 3
    %848 = vperm.xlu0 %847, %v187
    %v849 = vpop.permute.xlu0 %848
    %851 = vset.pattern.permute.xlu0 3
    %852 = vperm.xlu0 %851, %v188
    %v853 = vpop.permute.xlu0 %852
    %v855 = vadd.f32 %v807, %v825
    %v856 = vadd.f32 %v808, %v825
    %v857 = vadd.f32 %v809, %v829
    %v858 = vadd.f32 %v810, %v829
    %v859 = vadd.f32 %v811, %v833
    %v860 = vadd.f32 %v812, %v833
    %v861 = vadd.f32 %v813, %v837
    %v862 = vadd.f32 %v814, %v837
    %v863 = vadd.f32 %v815, %v841
    %v864 = vadd.f32 %v816, %v841
    %v865 = vadd.f32 %v817, %v845
    %v866 = vadd.f32 %v818, %v845
    %v867 = vadd.f32 %v819, %v849
    %v868 = vadd.f32 %v820, %v849
    %v869 = vadd.f32 %v821, %v853
    %v870 = vadd.f32 %v822, %v853
    %v871 = vmax.f32 %v855, 0.0
    %v872 = vmax.f32 %v856, 0.0
    %v873 = vmax.f32 %v857, 0.0
    %v874 = vmax.f32 %v858, 0.0
    %v875 = vmax.f32 %v859, 0.0
    %v876 = vmax.f32 %v860, 0.0
    %v877 = vmax.f32 %v861, 0.0
    %v878 = vmax.f32 %v862, 0.0
    %v879 = vmax.f32 %v863, 0.0
    %v880 = vmax.f32 %v864, 0.0
    %v881 = vmax.f32 %v865, 0.0
    %v882 = vmax.f32 %v866, 0.0
    %v883 = vmax.f32 %v867, 0.0
    %v884 = vmax.f32 %v868, 0.0
    %v885 = vmax.f32 %v869, 0.0
    %v886 = vmax.f32 %v870, 0.0
    %v887 = vld [vmem:[%s1 + $0x80] sm:$0xff]
    %v888 = vld [vmem:[%s1 + $0x88] sm:$0xff]
    %v889 = vld [vmem:[%s1 + $0x90] sm:$0xff]
    %v890 = vld [vmem:[%s1 + $0x98] sm:$0xff]
    %v892 = vsel %vm477, %v887, 0
    %v895 = vsel %vm477, %v888, 0
    %v898 = vsel %vm477, %v889, 0
    %v901 = vsel %vm477, %v890, 0
    %903 = vmatprep.subr.mxu0 %v872
    %904 = vmatpush1.msra.mxu0 %v871
    %905 = vmatprep.subr.mxu0 %v874
    %906 = vmatpush1.msra.mxu0 %v873
    %907 = vmatprep.subr.mxu0 %v876
    %908 = vmatpush1.msra.mxu0 %v875
    %909 = vmatprep.subr.mxu0 %v878
    %910 = vmatpush1.msra.mxu0 %v877
    %911 = vmatprep.subr.mxu0 %v880
    %912 = vmatpush1.msra.mxu0 %v879
    %913 = vmatprep.subr.mxu0 %v882
    %914 = vmatpush1.msra.mxu0 %v881
    %915 = vmatprep.subr.mxu0 %v884
    %916 = vmatpush1.msra.mxu0 %v883
    %917 = vmatprep.subr.mxu0 %v886
    %918 = vmatpush1.msra.mxu0 %v885
    %919 = vmatprep.subr.mxu0 0.0
    %920 = vmatpush1.msra.mxu0 0.0
    %921 = vmatprep.subr.mxu0 0.0
    %922 = vmatpush1.msra.mxu0 0.0
    %923 = vmatprep.subr.mxu0 0.0
    %924 = vmatpush1.msra.mxu0 0.0
    %925 = vmatprep.subr.mxu0 0.0
    %926 = vmatpush1.msra.mxu0 0.0
    %927 = vmatprep.subr.mxu0 0.0
    %928 = vmatpush1.msra.mxu0 0.0
    %929 = vmatprep.subr.mxu0 0.0
    %930 = vmatpush1.msra.mxu0 0.0
    %931 = vmatprep.subr.mxu0 0.0
    %932 = vmatpush1.msra.mxu0 0.0
    %933 = vmatprep.subr.mxu0 0.0
    %934 = vmatpush1.msra.mxu0 0.0
    %935 = vmatprep.subr.mxu0 0.0
    %936 = vmatpush1.msra.mxu0 0.0
    %937 = vmatprep.subr.mxu0 0.0
    %938 = vmatpush1.msra.mxu0 0.0
    %939 = vmatprep.subr.mxu0 0.0
    %940 = vmatpush1.msra.mxu0 0.0
    %941 = vmatprep.subr.mxu0 0.0
    %942 = vmatpush1.msra.mxu0 0.0
    %943 = vmatprep.subr.mxu0 0.0
    %944 = vmatpush1.msra.mxu0 0.0
    %945 = vmatprep.subr.mxu0 0.0
    %946 = vmatpush1.msra.mxu0 0.0
    %947 = vmatprep.subr.mxu0 0.0
    %948 = vmatpush1.msra.mxu0 0.0
    %949 = vmatprep.subr.mxu0 0.0
    %950 = vmatpush1.msra.mxu0 0.0
    %951 = vmatprep.subr.mxu0 0.0
    %952 = vmatpush1.msra.mxu0 0.0
    %953 = vmatprep.subr.mxu0 0.0
    %954 = vmatpush1.msra.mxu0 0.0
    %955 = vmatprep.subr.mxu0 0.0
    %956 = vmatpush1.msra.mxu0 0.0
    %957 = vmatprep.subr.mxu0 0.0
    %958 = vmatpush1.msra.mxu0 0.0
    %959 = vmatprep.subr.mxu0 0.0
    %960 = vmatpush1.msra.mxu0 0.0
    %961 = vmatprep.subr.mxu0 0.0
    %962 = vmatpush1.msra.mxu0 0.0
    %963 = vmatprep.subr.mxu0 0.0
    %964 = vmatpush1.msra.mxu0 0.0
    %965 = vmatprep.subr.mxu0 0.0
    %966 = vmatpush1.msra.mxu0 0.0
    %967 = vmatprep.mubr.f32.mxu0 0.0
    %968 = vmatmul.mubr.f32.gmra.mrb[0].mxu0 %v892
    %v969 = vpop.f32.mrb[0].mxu0
    %v970 = vadd.f32 0.0, %v969
    %v971 = vpop.f32.mrb[0].mxu0
    %v972 = vadd.f32 0.0, %v971
    %973 = vmatprep.mubr.f32.mxu0 0.0
    %974 = vmatmul.mubr.f32.gmra.mrb[0].mxu0 %v895
    %v975 = vpop.f32.mrb[0].mxu0
    %v976 = vadd.f32 0.0, %v975
    %v977 = vpop.f32.mrb[0].mxu0
    %v978 = vadd.f32 0.0, %v977
    %979 = vmatprep.mubr.f32.mxu0 0.0
    %980 = vmatmul.mubr.f32.gmra.mrb[0].mxu0 %v898
    %v981 = vpop.f32.mrb[0].mxu0
    %v982 = vadd.f32 0.0, %v981
    %v983 = vpop.f32.mrb[0].mxu0
    %v984 = vadd.f32 0.0, %v983
    %985 = vmatprep.mubr.f32.mxu0 0.0
    %986 = vmatmul.mubr.f32.gmra.mrb[0].mxu0 %v901
    %v987 = vpop.f32.mrb[0].mxu0
    %v988 = vadd.f32 0.0, %v987
    %v989 = vpop.f32.mrb[0].mxu0
    %v990 = vadd.f32 0.0, %v989
    %991 = vdwg.mxu0
    %v992 = vld [vmem:[%s2] sm:$0xff]
    %v993 = vld [vmem:[%s2 + $0x8] sm:$0xff]
    %v994 = vld [vmem:[%s2 + $0x10] sm:$0xff]
    %v995 = vld [vmem:[%s2 + $0x18] sm:$0xff]
    %v996 = vmul.f32 %v970, %v22
    %v997 = vmul.f32 %v972, %v23
    %v998 = vmul.f32 %v976, %v22
    %v999 = vmul.f32 %v978, %v23
    %v1000 = vmul.f32 %v982, %v22
    %v1001 = vmul.f32 %v984, %v23
    %v1002 = vmul.f32 %v988, %v22
    %v1003 = vmul.f32 %v990, %v23
    %v1004 = vadd.f32 %v996, %v997
    %1005 = vadd.xlane.f32.xlu0 %v1004
    %v1006 = vpop.xlane.xlu0 %1005
    %v1007 = vadd.f32 %v998, %v999
    %1008 = vadd.xlane.f32.xlu0 %v1007
    %v1009 = vpop.xlane.xlu0 %1008
    %v1010 = vadd.f32 %v1000, %v1001
    %1011 = vadd.xlane.f32.xlu0 %v1010
    %v1012 = vpop.xlane.xlu0 %1011
    %v1013 = vadd.f32 %v1002, %v1003
    %1014 = vadd.xlane.f32.xlu0 %v1013
    %v1015 = vpop.xlane.xlu0 %1014
    %v1016 = vmul.f32 %v1006, 0.00390625
    %v1017 = vmul.f32 %v1009, 0.00390625
    %v1018 = vmul.f32 %v1012, 0.00390625
    %v1019 = vmul.f32 %v1015, 0.00390625
    %v1020 = vsub.f32 %v970, %v1016
    %v1021 = vsub.f32 %v972, %v1016
    %v1022 = vsub.f32 %v976, %v1017
    %v1023 = vsub.f32 %v978, %v1017
    %v1024 = vsub.f32 %v982, %v1018
    %v1025 = vsub.f32 %v984, %v1018
    %v1026 = vsub.f32 %v988, %v1019
    %v1027 = vsub.f32 %v990, %v1019
    %v1028 = vmul.f32 %v1020, %v1020
    %v1029 = vmul.f32 %v1021, %v1021
    %v1030 = vmul.f32 %v1022, %v1022
    %v1031 = vmul.f32 %v1023, %v1023
    %v1032 = vmul.f32 %v1024, %v1024
    %v1033 = vmul.f32 %v1025, %v1025
    %v1034 = vmul.f32 %v1026, %v1026
    %v1035 = vmul.f32 %v1027, %v1027
    %v1036 = vmul.f32 %v1028, %v22
    %v1037 = vmul.f32 %v1029, %v23
    %v1038 = vmul.f32 %v1030, %v22
    %v1039 = vmul.f32 %v1031, %v23
    %v1040 = vmul.f32 %v1032, %v22
    %v1041 = vmul.f32 %v1033, %v23
    %v1042 = vmul.f32 %v1034, %v22
    %v1043 = vmul.f32 %v1035, %v23
    %v1044 = vadd.f32 %v1036, %v1037
    %1045 = vadd.xlane.f32.xlu0 %v1044
    %v1046 = vpop.xlane.xlu0 %1045
    %v1047 = vadd.f32 %v1038, %v1039
    %1048 = vadd.xlane.f32.xlu0 %v1047
    %v1049 = vpop.xlane.xlu0 %1048
    %v1050 = vadd.f32 %v1040, %v1041
    %1051 = vadd.xlane.f32.xlu0 %v1050
    %v1052 = vpop.xlane.xlu0 %1051
    %v1053 = vadd.f32 %v1042, %v1043
    %1054 = vadd.xlane.f32.xlu0 %v1053
    %v1055 = vpop.xlane.xlu0 %1054
    %v1056 = vmul.f32 %v1046, 0.00390625
    %v1057 = vmul.f32 %v1049, 0.00390625
    %v1058 = vmul.f32 %v1052, 0.00390625
    %v1059 = vmul.f32 %v1055, 0.00390625
    %v1060 = vadd.f32 %v1056, 1e-05
    %v1061 = vadd.f32 %v1057, 1e-05
    %v1062 = vadd.f32 %v1058, 1e-05
    %v1063 = vadd.f32 %v1059, 1e-05
    %v1064 = vrsqrt.pop %v1060
    %v1065 = vrsqrt.pop %v1061
    %v1066 = vrsqrt.pop %v1062
    %v1067 = vrsqrt.pop %v1063
    %v1068 = vmul.f32 %v992, %v1064
    %v1069 = vmul.f32 %v993, %v1065
    %v1070 = vmul.f32 %v994, %v1066
    %v1071 = vmul.f32 %v995, %v1067
    %1073 = vset.pattern.permute.xlu0 4
    %1074 = vperm.xlu0 %1073, %v1068
    %v1075 = vpop.permute.xlu0 %1074
    %1078 = vset.pattern.permute.xlu0 4
    %1079 = vperm.xlu0 %1078, %v1069
    %v1080 = vpop.permute.xlu0 %1079
    %1083 = vset.pattern.permute.xlu0 4
    %1084 = vperm.xlu0 %1083, %v1070
    %v1085 = vpop.permute.xlu0 %1084
    %1088 = vset.pattern.permute.xlu0 4
    %1089 = vperm.xlu0 %1088, %v1071
    %v1090 = vpop.permute.xlu0 %1089
    %v1092 = vmul.f32 %v1020, %v1075
    %v1093 = vmul.f32 %v1021, %v1075
    %v1094 = vmul.f32 %v1022, %v1080
    %v1095 = vmul.f32 %v1023, %v1080
    %v1096 = vmul.f32 %v1024, %v1085
    %v1097 = vmul.f32 %v1025, %v1085
    %v1098 = vmul.f32 %v1026, %v1090
    %v1099 = vmul.f32 %v1027, %v1090
    %1101 = vset.pattern.permute.xlu0 5
    %1102 = vperm.xlu0 %1101, %v992
    %v1103 = vpop.permute.xlu0 %1102
    %1106 = vset.pattern.permute.xlu0 5
    %1107 = vperm.xlu0 %1106, %v993
    %v1108 = vpop.permute.xlu0 %1107
    %1111 = vset.pattern.permute.xlu0 5
    %1112 = vperm.xlu0 %1111, %v994
    %v1113 = vpop.permute.xlu0 %1112
    %1116 = vset.pattern.permute.xlu0 5
    %1117 = vperm.xlu0 %1116, %v995
    %v1118 = vpop.permute.xlu0 %1117
    %v1120 = vadd.f32 %v1092, %v1103
    %v1121 = vadd.f32 %v1093, %v1103
    %v1122 = vadd.f32 %v1094, %v1108
    %v1123 = vadd.f32 %v1095, %v1108
    %v1124 = vadd.f32 %v1096, %v1113
    %v1125 = vadd.f32 %v1097, %v1113
    %v1126 = vadd.f32 %v1098, %v1118
    %v1127 = vadd.f32 %v1099, %v1118
    %v1128 = vmax.f32 %v1120, 0.0
    %v1129 = vmax.f32 %v1121, 0.0
    %v1130 = vmax.f32 %v1122, 0.0
    %v1131 = vmax.f32 %v1123, 0.0
    %v1132 = vmax.f32 %v1124, 0.0
    %v1133 = vmax.f32 %v1125, 0.0
    %v1134 = vmax.f32 %v1126, 0.0
    %v1135 = vmax.f32 %v1127, 0.0
    %v1136 = vld [vmem:[%s1 + $0xc0] sm:$0xff]
    %v1137 = vld [vmem:[%s1 + $0xc8] sm:$0xff]
    %v1138 = vld [vmem:[%s1 + $0xd0] sm:$0xff]
    %v1139 = vld [vmem:[%s1 + $0xd8] sm:$0xff]
    %vm1140 = vcmask 261120
    %v1142 = vsel %vm1140, %v1136, 0
    %v1145 = vsel %vm1140, %v1137, 0
    %v1148 = vsel %vm1140, %v1138, 0
    %v1151 = vsel %vm1140, %v1139, 0
    %1153 = vmatprep.subr.mxu0 %v1129
    %1154 = vmatpush1.msra.mxu0 %v1128
    %1155 = vmatprep.subr.mxu0 %v1131
    %1156 = vmatpush1.msra.mxu0 %v1130
    %1157 = vmatprep.subr.mxu0 %v1133
    %1158 = vmatpush1.msra.mxu0 %v1132
    %1159 = vmatprep.subr.mxu0 %v1135
    %1160 = vmatpush1.msra.mxu0 %v1134
    %1161 = vmatprep.subr.mxu0 0.0
    %1162 = vmatpush1.msra.mxu0 0.0
    %1163 = vmatprep.subr.mxu0 0.0
    %1164 = vmatpush1.msra.mxu0 0.0
    %1165 = vmatprep.subr.mxu0 0.0
    %1166 = vmatpush1.msra.mxu0 0.0
    %1167 = vmatprep.subr.mxu0 0.0
    %1168 = vmatpush1.msra.mxu0 0.0
    %1169 = vmatprep.subr.mxu0 0.0
    %1170 = vmatpush1.msra.mxu0 0.0
    %1171 = vmatprep.subr.mxu0 0.0
    %1172 = vmatpush1.msra.mxu0 0.0
    %1173 = vmatprep.subr.mxu0 0.0
    %1174 = vmatpush1.msra.mxu0 0.0
    %1175 = vmatprep.subr.mxu0 0.0
    %1176 = vmatpush1.msra.mxu0 0.0
    %1177 = vmatprep.subr.mxu0 0.0
    %1178 = vmatpush1.msra.mxu0 0.0
    %1179 = vmatprep.subr.mxu0 0.0
    %1180 = vmatpush1.msra.mxu0 0.0
    %1181 = vmatprep.subr.mxu0 0.0
    %1182 = vmatpush1.msra.mxu0 0.0
    %1183 = vmatprep.subr.mxu0 0.0
    %1184 = vmatpush1.msra.mxu0 0.0
    %1185 = vmatprep.subr.mxu0 0.0
    %1186 = vmatpush1.msra.mxu0 0.0
    %1187 = vmatprep.subr.mxu0 0.0
    %1188 = vmatpush1.msra.mxu0 0.0
    %1189 = vmatprep.subr.mxu0 0.0
    %1190 = vmatpush1.msra.mxu0 0.0
    %1191 = vmatprep.subr.mxu0 0.0
    %1192 = vmatpush1.msra.mxu0 0.0
    %1193 = vmatprep.subr.mxu0 0.0
    %1194 = vmatpush1.msra.mxu0 0.0
    %1195 = vmatprep.subr.mxu0 0.0
    %1196 = vmatpush1.msra.mxu0 0.0
    %1197 = vmatprep.subr.mxu0 0.0
    %1198 = vmatpush1.msra.mxu0 0.0
    %1199 = vmatprep.subr.mxu0 0.0
    %1200 = vmatpush1.msra.mxu0 0.0
    %1201 = vmatprep.subr.mxu0 0.0
    %1202 = vmatpush1.msra.mxu0 0.0
    %1203 = vmatprep.subr.mxu0 0.0
    %1204 = vmatpush1.msra.mxu0 0.0
    %1205 = vmatprep.subr.mxu0 0.0
    %1206 = vmatpush1.msra.mxu0 0.0
    %1207 = vmatprep.subr.mxu0 0.0
    %1208 = vmatpush1.msra.mxu0 0.0
    %1209 = vmatprep.subr.mxu0 0.0
    %1210 = vmatpush1.msra.mxu0 0.0
    %1211 = vmatprep.subr.mxu0 0.0
    %1212 = vmatpush1.msra.mxu0 0.0
    %1213 = vmatprep.subr.mxu0 0.0
    %1214 = vmatpush1.msra.mxu0 0.0
    %1215 = vmatprep.subr.mxu0 0.0
    %1216 = vmatpush1.msra.mxu0 0.0
    %1217 = vmatprep.mubr.f32.mxu0 0.0
    %1218 = vmatmul.mubr.f32.gmra.mrb[0].mxu0 %v1142
    %v1219 = vpop.f32.mrb[0].mxu0
    %v1220 = vadd.f32 0.0, %v1219
    %v1221 = vpop.f32.mrb[0].mxu0
    %v1222 = vadd.f32 0.0, %v1221
    %1223 = vmatprep.mubr.f32.mxu0 0.0
    %1224 = vmatmul.mubr.f32.gmra.mrb[0].mxu0 %v1145
    %v1225 = vpop.f32.mrb[0].mxu0
    %v1226 = vadd.f32 0.0, %v1225
    %v1227 = vpop.f32.mrb[0].mxu0
    %v1228 = vadd.f32 0.0, %v1227
    %1229 = vmatprep.mubr.f32.mxu0 0.0
    %1230 = vmatmul.mubr.f32.gmra.mrb[0].mxu0 %v1148
    %v1231 = vpop.f32.mrb[0].mxu0
    %v1232 = vadd.f32 0.0, %v1231
    %v1233 = vpop.f32.mrb[0].mxu0
    %v1234 = vadd.f32 0.0, %v1233
    %1235 = vmatprep.mubr.f32.mxu0 0.0
    %1236 = vmatmul.mubr.f32.gmra.mrb[0].mxu0 %v1151
    %v1237 = vpop.f32.mrb[0].mxu0
    %v1238 = vadd.f32 0.0, %v1237
    %v1239 = vpop.f32.mrb[0].mxu0
    %v1240 = vadd.f32 0.0, %v1239
    %1241 = vdwg.mxu0
    %v1242 = vmul.f32 %v1220, %v22
    %v1243 = vmul.f32 %v1222, %v23
    %v1244 = vmul.f32 %v1226, %v22
    %v1245 = vmul.f32 %v1228, %v23
    %v1246 = vmul.f32 %v1232, %v22
    %v1247 = vmul.f32 %v1234, %v23
    %v1248 = vmul.f32 %v1238, %v22
    %v1249 = vmul.f32 %v1240, %v23
    %v1250 = vadd.f32 %v1242, %v1243
    %1251 = vadd.xlane.f32.xlu0 %v1250
    %v1252 = vpop.xlane.xlu0 %1251
    %v1253 = vadd.f32 %v1244, %v1245
    %1254 = vadd.xlane.f32.xlu0 %v1253
    %v1255 = vpop.xlane.xlu0 %1254
    %v1256 = vadd.f32 %v1246, %v1247
    %1257 = vadd.xlane.f32.xlu0 %v1256
    %v1258 = vpop.xlane.xlu0 %1257
    %v1259 = vadd.f32 %v1248, %v1249
    %1260 = vadd.xlane.f32.xlu0 %v1259
    %v1261 = vpop.xlane.xlu0 %1260
    %v1262 = vmul.f32 %v1252, 0.00390625
    %v1263 = vmul.f32 %v1255, 0.00390625
    %v1264 = vmul.f32 %v1258, 0.00390625
    %v1265 = vmul.f32 %v1261, 0.00390625
    %v1266 = vsub.f32 %v1220, %v1262
    %v1267 = vsub.f32 %v1222, %v1262
    %v1268 = vsub.f32 %v1226, %v1263
    %v1269 = vsub.f32 %v1228, %v1263
    %v1270 = vsub.f32 %v1232, %v1264
    %v1271 = vsub.f32 %v1234, %v1264
    %v1272 = vsub.f32 %v1238, %v1265
    %v1273 = vsub.f32 %v1240, %v1265
    %v1274 = vmul.f32 %v1266, %v1266
    %v1275 = vmul.f32 %v1267, %v1267
    %v1276 = vmul.f32 %v1268, %v1268
    %v1277 = vmul.f32 %v1269, %v1269
    %v1278 = vmul.f32 %v1270, %v1270
    %v1279 = vmul.f32 %v1271, %v1271
    %v1280 = vmul.f32 %v1272, %v1272
    %v1281 = vmul.f32 %v1273, %v1273
    %v1282 = vmul.f32 %v1274, %v22
    %v1283 = vmul.f32 %v1275, %v23
    %v1284 = vmul.f32 %v1276, %v22
    %v1285 = vmul.f32 %v1277, %v23
    %v1286 = vmul.f32 %v1278, %v22
    %v1287 = vmul.f32 %v1279, %v23
    %v1288 = vmul.f32 %v1280, %v22
    %v1289 = vmul.f32 %v1281, %v23
    %v1290 = vadd.f32 %v1282, %v1283
    %1291 = vadd.xlane.f32.xlu0 %v1290
    %v1292 = vpop.xlane.xlu0 %1291
    %v1293 = vadd.f32 %v1284, %v1285
    %1294 = vadd.xlane.f32.xlu0 %v1293
    %v1295 = vpop.xlane.xlu0 %1294
    %v1296 = vadd.f32 %v1286, %v1287
    %1297 = vadd.xlane.f32.xlu0 %v1296
    %v1298 = vpop.xlane.xlu0 %1297
    %v1299 = vadd.f32 %v1288, %v1289
    %1300 = vadd.xlane.f32.xlu0 %v1299
    %v1301 = vpop.xlane.xlu0 %1300
    %v1302 = vmul.f32 %v1292, 0.00390625
    %v1303 = vmul.f32 %v1295, 0.00390625
    %v1304 = vmul.f32 %v1298, 0.00390625
    %v1305 = vmul.f32 %v1301, 0.00390625
    %v1306 = vadd.f32 %v1302, 1e-05
    %v1307 = vadd.f32 %v1303, 1e-05
    %v1308 = vadd.f32 %v1304, 1e-05
    %v1309 = vadd.f32 %v1305, 1e-05
    %v1310 = vrsqrt.pop %v1306
    %v1311 = vrsqrt.pop %v1307
    %v1312 = vrsqrt.pop %v1308
    %v1313 = vrsqrt.pop %v1309
    %v1314 = vmul.f32 %v992, %v1310
    %v1315 = vmul.f32 %v993, %v1311
    %v1316 = vmul.f32 %v994, %v1312
    %v1317 = vmul.f32 %v995, %v1313
    %1319 = vset.pattern.permute.xlu0 6
    %1320 = vperm.xlu0 %1319, %v1314
    %v1321 = vpop.permute.xlu0 %1320
    %1324 = vset.pattern.permute.xlu0 6
    %1325 = vperm.xlu0 %1324, %v1315
    %v1326 = vpop.permute.xlu0 %1325
    %1329 = vset.pattern.permute.xlu0 6
    %1330 = vperm.xlu0 %1329, %v1316
    %v1331 = vpop.permute.xlu0 %1330
    %1334 = vset.pattern.permute.xlu0 6
    %1335 = vperm.xlu0 %1334, %v1317
    %v1336 = vpop.permute.xlu0 %1335
    %v1338 = vmul.f32 %v1266, %v1321
    %v1339 = vmul.f32 %v1267, %v1321
    %v1340 = vmul.f32 %v1268, %v1326
    %v1341 = vmul.f32 %v1269, %v1326
    %v1342 = vmul.f32 %v1270, %v1331
    %v1343 = vmul.f32 %v1271, %v1331
    %v1344 = vmul.f32 %v1272, %v1336
    %v1345 = vmul.f32 %v1273, %v1336
    %1346 = vset.pattern.permute.xlu0 7
    %1347 = vperm.xlu0 %1346, %v992
    %v1348 = vpop.permute.xlu0 %1347
    %1350 = vset.pattern.permute.xlu0 7
    %1351 = vperm.xlu0 %1350, %v993
    %v1352 = vpop.permute.xlu0 %1351
    %1354 = vset.pattern.permute.xlu0 7
    %1355 = vperm.xlu0 %1354, %v994
    %v1356 = vpop.permute.xlu0 %1355
    %1358 = vset.pattern.permute.xlu0 7
    %1359 = vperm.xlu0 %1358, %v995
    %v1360 = vpop.permute.xlu0 %1359
    %v1362 = vadd.f32 %v1338, %v1348
    %v1363 = vadd.f32 %v1339, %v1348
    %v1364 = vadd.f32 %v1340, %v1352
    %v1365 = vadd.f32 %v1341, %v1352
    %v1366 = vadd.f32 %v1342, %v1356
    %v1367 = vadd.f32 %v1343, %v1356
    %v1368 = vadd.f32 %v1344, %v1360
    %v1369 = vadd.f32 %v1345, %v1360
    %v1370 = vmax.f32 %v1362, 0.0
    %v1371 = vmax.f32 %v1363, 0.0
    %v1372 = vmax.f32 %v1364, 0.0
    %v1373 = vmax.f32 %v1365, 0.0
    %v1374 = vmax.f32 %v1366, 0.0
    %v1375 = vmax.f32 %v1367, 0.0
    %v1376 = vmax.f32 %v1368, 0.0
    %v1377 = vmax.f32 %v1369, 0.0
    %v1378 = vld [vmem:[%s1 + $0x100] sm:$0xff]
    %v1379 = vld [vmem:[%s1 + $0x108] sm:$0xff]
    %v1380 = vld [vmem:[%s1 + $0x110] sm:$0xff]
    %v1381 = vld [vmem:[%s1 + $0x118] sm:$0xff]
    %v1383 = vsel %vm1140, %v1378, 0
    %v1386 = vsel %vm1140, %v1379, 0
    %v1389 = vsel %vm1140, %v1380, 0
    %v1392 = vsel %vm1140, %v1381, 0
    %1394 = vmatprep.subr.mxu0 %v1371
    %1395 = vmatpush1.msra.mxu0 %v1370
    %1396 = vmatprep.subr.mxu0 %v1373
    %1397 = vmatpush1.msra.mxu0 %v1372
    %1398 = vmatprep.subr.mxu0 %v1375
    %1399 = vmatpush1.msra.mxu0 %v1374
    %1400 = vmatprep.subr.mxu0 %v1377
    %1401 = vmatpush1.msra.mxu0 %v1376
    %1402 = vmatprep.subr.mxu0 0.0
    %1403 = vmatpush1.msra.mxu0 0.0
    %1404 = vmatprep.subr.mxu0 0.0
    %1405 = vmatpush1.msra.mxu0 0.0
    %1406 = vmatprep.subr.mxu0 0.0
    %1407 = vmatpush1.msra.mxu0 0.0
    %1408 = vmatprep.subr.mxu0 0.0
    %1409 = vmatpush1.msra.mxu0 0.0
    %1410 = vmatprep.subr.mxu0 0.0
    %1411 = vmatpush1.msra.mxu0 0.0
    %1412 = vmatprep.subr.mxu0 0.0
    %1413 = vmatpush1.msra.mxu0 0.0
    %1414 = vmatprep.subr.mxu0 0.0
    %1415 = vmatpush1.msra.mxu0 0.0
    %1416 = vmatprep.subr.mxu0 0.0
    %1417 = vmatpush1.msra.mxu0 0.0
    %1418 = vmatprep.subr.mxu0 0.0
    %1419 = vmatpush1.msra.mxu0 0.0
    %1420 = vmatprep.subr.mxu0 0.0
    %1421 = vmatpush1.msra.mxu0 0.0
    %1422 = vmatprep.subr.mxu0 0.0
    %1423 = vmatpush1.msra.mxu0 0.0
    %1424 = vmatprep.subr.mxu0 0.0
    %1425 = vmatpush1.msra.mxu0 0.0
    %1426 = vmatprep.subr.mxu0 0.0
    %1427 = vmatpush1.msra.mxu0 0.0
    %1428 = vmatprep.subr.mxu0 0.0
    %1429 = vmatpush1.msra.mxu0 0.0
    %1430 = vmatprep.subr.mxu0 0.0
    %1431 = vmatpush1.msra.mxu0 0.0
    %1432 = vmatprep.subr.mxu0 0.0
    %1433 = vmatpush1.msra.mxu0 0.0
    %1434 = vmatprep.subr.mxu0 0.0
    %1435 = vmatpush1.msra.mxu0 0.0
    %1436 = vmatprep.subr.mxu0 0.0
    %1437 = vmatpush1.msra.mxu0 0.0
    %1438 = vmatprep.subr.mxu0 0.0
    %1439 = vmatpush1.msra.mxu0 0.0
    %1440 = vmatprep.subr.mxu0 0.0
    %1441 = vmatpush1.msra.mxu0 0.0
    %1442 = vmatprep.subr.mxu0 0.0
    %1443 = vmatpush1.msra.mxu0 0.0
    %1444 = vmatprep.subr.mxu0 0.0
    %1445 = vmatpush1.msra.mxu0 0.0
    %1446 = vmatprep.subr.mxu0 0.0
    %1447 = vmatpush1.msra.mxu0 0.0
    %1448 = vmatprep.subr.mxu0 0.0
    %1449 = vmatpush1.msra.mxu0 0.0
    %1450 = vmatprep.subr.mxu0 0.0
    %1451 = vmatpush1.msra.mxu0 0.0
    %1452 = vmatprep.subr.mxu0 0.0
    %1453 = vmatpush1.msra.mxu0 0.0
    %1454 = vmatprep.subr.mxu0 0.0
    %1455 = vmatpush1.msra.mxu0 0.0
    %1456 = vmatprep.subr.mxu0 0.0
    %1457 = vmatpush1.msra.mxu0 0.0
    %1458 = vmatprep.mubr.f32.mxu0 0.0
    %1459 = vmatmul.mubr.f32.gmra.mrb[0].mxu0 %v1383
    %v1460 = vpop.f32.mrb[0].mxu0
    %v1461 = vadd.f32 0.0, %v1460
    %v1462 = vpop.f32.mrb[0].mxu0
    %v1463 = vadd.f32 0.0, %v1462
    %1464 = vmatprep.mubr.f32.mxu0 0.0
    %1465 = vmatmul.mubr.f32.gmra.mrb[0].mxu0 %v1386
    %v1466 = vpop.f32.mrb[0].mxu0
    %v1467 = vadd.f32 0.0, %v1466
    %v1468 = vpop.f32.mrb[0].mxu0
    %v1469 = vadd.f32 0.0, %v1468
    %1470 = vmatprep.mubr.f32.mxu0 0.0
    %1471 = vmatmul.mubr.f32.gmra.mrb[0].mxu0 %v1389
    %v1472 = vpop.f32.mrb[0].mxu0
    %v1473 = vadd.f32 0.0, %v1472
    %v1474 = vpop.f32.mrb[0].mxu0
    %v1475 = vadd.f32 0.0, %v1474
    %1476 = vmatprep.mubr.f32.mxu0 0.0
    %1477 = vmatmul.mubr.f32.gmra.mrb[0].mxu0 %v1392
    %v1478 = vpop.f32.mrb[0].mxu0
    %v1479 = vadd.f32 0.0, %v1478
    %v1480 = vpop.f32.mrb[0].mxu0
    %v1481 = vadd.f32 0.0, %v1480
    %1482 = vdwg.mxu0
    %v1483 = vmul.f32 %v1461, %v22
    %v1484 = vmul.f32 %v1463, %v23
    %v1485 = vmul.f32 %v1467, %v22
    %v1486 = vmul.f32 %v1469, %v23
    %v1487 = vmul.f32 %v1473, %v22
    %v1488 = vmul.f32 %v1475, %v23
    %v1489 = vmul.f32 %v1479, %v22
    %v1490 = vmul.f32 %v1481, %v23
    %v1491 = vadd.f32 %v1483, %v1484
    %1492 = vadd.xlane.f32.xlu0 %v1491
    %v1493 = vpop.xlane.xlu0 %1492
    %v1494 = vadd.f32 %v1485, %v1486
    %1495 = vadd.xlane.f32.xlu0 %v1494
    %v1496 = vpop.xlane.xlu0 %1495
    %v1497 = vadd.f32 %v1487, %v1488
    %1498 = vadd.xlane.f32.xlu0 %v1497
    %v1499 = vpop.xlane.xlu0 %1498
    %v1500 = vadd.f32 %v1489, %v1490
    %1501 = vadd.xlane.f32.xlu0 %v1500
    %v1502 = vpop.xlane.xlu0 %1501
    %v1503 = vmul.f32 %v1493, 0.00390625
    %v1504 = vmul.f32 %v1496, 0.00390625
    %v1505 = vmul.f32 %v1499, 0.00390625
    %v1506 = vmul.f32 %v1502, 0.00390625
    %v1507 = vsub.f32 %v1461, %v1503
    %v1508 = vsub.f32 %v1463, %v1503
    %v1509 = vsub.f32 %v1467, %v1504
    %v1510 = vsub.f32 %v1469, %v1504
    %v1511 = vsub.f32 %v1473, %v1505
    %v1512 = vsub.f32 %v1475, %v1505
    %v1513 = vsub.f32 %v1479, %v1506
    %v1514 = vsub.f32 %v1481, %v1506
    %v1515 = vmul.f32 %v1507, %v1507
    %v1516 = vmul.f32 %v1508, %v1508
    %v1517 = vmul.f32 %v1509, %v1509
    %v1518 = vmul.f32 %v1510, %v1510
    %v1519 = vmul.f32 %v1511, %v1511
    %v1520 = vmul.f32 %v1512, %v1512
    %v1521 = vmul.f32 %v1513, %v1513
    %v1522 = vmul.f32 %v1514, %v1514
    %v1523 = vmul.f32 %v1515, %v22
    %v1524 = vmul.f32 %v1516, %v23
    %v1525 = vmul.f32 %v1517, %v22
    %v1526 = vmul.f32 %v1518, %v23
    %v1527 = vmul.f32 %v1519, %v22
    %v1528 = vmul.f32 %v1520, %v23
    %v1529 = vmul.f32 %v1521, %v22
    %v1530 = vmul.f32 %v1522, %v23
    %v1531 = vadd.f32 %v1523, %v1524
    %1532 = vadd.xlane.f32.xlu0 %v1531
    %v1533 = vpop.xlane.xlu0 %1532
    %v1534 = vadd.f32 %v1525, %v1526
    %1535 = vadd.xlane.f32.xlu0 %v1534
    %v1536 = vpop.xlane.xlu0 %1535
    %v1537 = vadd.f32 %v1527, %v1528
    %1538 = vadd.xlane.f32.xlu0 %v1537
    %v1539 = vpop.xlane.xlu0 %1538
    %v1540 = vadd.f32 %v1529, %v1530
    %1541 = vadd.xlane.f32.xlu0 %v1540
    %v1542 = vpop.xlane.xlu0 %1541
    %v1543 = vmul.f32 %v1533, 0.00390625
    %v1544 = vmul.f32 %v1536, 0.00390625
    %v1545 = vmul.f32 %v1539, 0.00390625
    %v1546 = vmul.f32 %v1542, 0.00390625
    %v1547 = vadd.f32 %v1543, 1e-05
    %v1548 = vadd.f32 %v1544, 1e-05
    %v1549 = vadd.f32 %v1545, 1e-05
    %v1550 = vadd.f32 %v1546, 1e-05
    %v1551 = vrsqrt.pop %v1547
    %v1552 = vrsqrt.pop %v1548
    %v1553 = vrsqrt.pop %v1549
    %v1554 = vrsqrt.pop %v1550
    %v1555 = vmul.f32 %v992, %v1551
    %v1556 = vmul.f32 %v993, %v1552
    %v1557 = vmul.f32 %v994, %v1553
    %v1558 = vmul.f32 %v995, %v1554
    %1560 = vset.pattern.permute.xlu0 8
    %1561 = vperm.xlu0 %1560, %v1555
    %v1562 = vpop.permute.xlu0 %1561
    %1565 = vset.pattern.permute.xlu0 8
    %1566 = vperm.xlu0 %1565, %v1556
    %v1567 = vpop.permute.xlu0 %1566
    %1570 = vset.pattern.permute.xlu0 8
    %1571 = vperm.xlu0 %1570, %v1557
    %v1572 = vpop.permute.xlu0 %1571
    %1575 = vset.pattern.permute.xlu0 8
    %1576 = vperm.xlu0 %1575, %v1558
    %v1577 = vpop.permute.xlu0 %1576
    %v1579 = vmul.f32 %v1507, %v1562
    %v1580 = vmul.f32 %v1508, %v1562
    %v1581 = vmul.f32 %v1509, %v1567
    %v1582 = vmul.f32 %v1510, %v1567
    %v1583 = vmul.f32 %v1511, %v1572
    %v1584 = vmul.f32 %v1512, %v1572
    %v1585 = vmul.f32 %v1513, %v1577
    %v1586 = vmul.f32 %v1514, %v1577
    %1587 = vset.pattern.permute.xlu0 9
    %1588 = vperm.xlu0 %1587, %v992
    %v1589 = vpop.permute.xlu0 %1588
    %1591 = vset.pattern.permute.xlu0 9
    %1592 = vperm.xlu0 %1591, %v993
    %v1593 = vpop.permute.xlu0 %1592
    %1595 = vset.pattern.permute.xlu0 9
    %1596 = vperm.xlu0 %1595, %v994
    %v1597 = vpop.permute.xlu0 %1596
    %1599 = vset.pattern.permute.xlu0 9
    %1600 = vperm.xlu0 %1599, %v995
    %v1601 = vpop.permute.xlu0 %1600
    %v1603 = vadd.f32 %v1579, %v1589
    %v1604 = vadd.f32 %v1580, %v1589
    %v1605 = vadd.f32 %v1581, %v1593
    %v1606 = vadd.f32 %v1582, %v1593
    %v1607 = vadd.f32 %v1583, %v1597
    %v1608 = vadd.f32 %v1584, %v1597
    %v1609 = vadd.f32 %v1585, %v1601
    %v1610 = vadd.f32 %v1586, %v1601
    %v1611 = vmax.f32 %v1603, 0.0
    %v1612 = vmax.f32 %v1604, 0.0
    %v1613 = vmax.f32 %v1605, 0.0
    %v1614 = vmax.f32 %v1606, 0.0
    %v1615 = vmax.f32 %v1607, 0.0
    %v1616 = vmax.f32 %v1608, 0.0
    %v1617 = vmax.f32 %v1609, 0.0
    %v1618 = vmax.f32 %v1610, 0.0
    %v1619 = vld [vmem:[%s1 + $0x140] sm:$0x1]
    %v1620 = vld [vmem:[%s2] sm:$0x1]
    %1622 = vset.pattern.permute.xlu0 10
    %1623 = vperm.xlu0 %1622, %v1620
    %v1624 = vpop.permute.xlu0 %1623
    %v1627 = vsel %vm1140, %v1619, 0
    %1629 = vmatprep.subr.mxu0 %v1612
    %1630 = vmatpush1.msra.mxu0 %v1611
    %1631 = vmatprep.subr.mxu0 %v1614
    %1632 = vmatpush1.msra.mxu0 %v1613
    %1633 = vmatprep.subr.mxu0 %v1616
    %1634 = vmatpush1.msra.mxu0 %v1615
    %1635 = vmatprep.subr.mxu0 %v1618
    %1636 = vmatpush1.msra.mxu0 %v1617
    %1637 = vmatprep.subr.mxu0 0.0
    %1638 = vmatpush1.msra.mxu0 0.0
    %1639 = vmatprep.subr.mxu0 0.0
    %1640 = vmatpush1.msra.mxu0 0.0
    %1641 = vmatprep.subr.mxu0 0.0
    %1642 = vmatpush1.msra.mxu0 0.0
    %1643 = vmatprep.subr.mxu0 0.0
    %1644 = vmatpush1.msra.mxu0 0.0
    %1645 = vmatprep.subr.mxu0 0.0
    %1646 = vmatpush1.msra.mxu0 0.0
    %1647 = vmatprep.subr.mxu0 0.0
    %1648 = vmatpush1.msra.mxu0 0.0
    %1649 = vmatprep.subr.mxu0 0.0
    %1650 = vmatpush1.msra.mxu0 0.0
    %1651 = vmatprep.subr.mxu0 0.0
    %1652 = vmatpush1.msra.mxu0 0.0
    %1653 = vmatprep.subr.mxu0 0.0
    %1654 = vmatpush1.msra.mxu0 0.0
    %1655 = vmatprep.subr.mxu0 0.0
    %1656 = vmatpush1.msra.mxu0 0.0
    %1657 = vmatprep.subr.mxu0 0.0
    %1658 = vmatpush1.msra.mxu0 0.0
    %1659 = vmatprep.subr.mxu0 0.0
    %1660 = vmatpush1.msra.mxu0 0.0
    %1661 = vmatprep.subr.mxu0 0.0
    %1662 = vmatpush1.msra.mxu0 0.0
    %1663 = vmatprep.subr.mxu0 0.0
    %1664 = vmatpush1.msra.mxu0 0.0
    %1665 = vmatprep.subr.mxu0 0.0
    %1666 = vmatpush1.msra.mxu0 0.0
    %1667 = vmatprep.subr.mxu0 0.0
    %1668 = vmatpush1.msra.mxu0 0.0
    %1669 = vmatprep.subr.mxu0 0.0
    %1670 = vmatpush1.msra.mxu0 0.0
    %1671 = vmatprep.subr.mxu0 0.0
    %1672 = vmatpush1.msra.mxu0 0.0
    %1673 = vmatprep.subr.mxu0 0.0
    %1674 = vmatpush1.msra.mxu0 0.0
    %1675 = vmatprep.subr.mxu0 0.0
    %1676 = vmatpush1.msra.mxu0 0.0
    %1677 = vmatprep.subr.mxu0 0.0
    %1678 = vmatpush1.msra.mxu0 0.0
    %1679 = vmatprep.subr.mxu0 0.0
    %1680 = vmatpush1.msra.mxu0 0.0
    %1681 = vmatprep.subr.mxu0 0.0
    %1682 = vmatpush1.msra.mxu0 0.0
    %1683 = vmatprep.subr.mxu0 0.0
    %1684 = vmatpush1.msra.mxu0 0.0
    %1685 = vmatprep.subr.mxu0 0.0
    %1686 = vmatpush1.msra.mxu0 0.0
    %1687 = vmatprep.subr.mxu0 0.0
    %1688 = vmatpush1.msra.mxu0 0.0
    %1689 = vmatprep.subr.mxu0 0.0
    %1690 = vmatpush1.msra.mxu0 0.0
    %1691 = vmatprep.subr.mxu0 0.0
    %1692 = vmatpush1.msra.mxu0 0.0
    %1693 = vmatprep.mubr.f32.mxu0 0.0
    %1694 = vmatmul.mubr.f32.gmra.mrb[0].mxu0 %v1627
    %v1695 = vpop.f32.mrb[0].mxu0
    %v1696 = vadd.f32 %v1624, %v1695
    %v1697 = vpop.f32.mrb[0].mxu0
    %v1698 = vadd.f32 %v1624, %v1697
    %1699 = vdwg.mxu0
    %v1700 = vsub.f32 0.0, %v1696
    %v1701 = vsub.f32 0.0, %v1698
    %v1702 = vmul.f32 %v1700, 1.442695
    %v1703 = vpow.pop %v1702
    %v1704 = vmul.f32 %v1701, 1.442695
    %v1705 = vpow.pop %v1704
    %v1706 = vadd.f32 %v1703, 1.0
    %v1707 = vadd.f32 %v1705, 1.0
    %v1708 = vrcp.pop %v1706
    %v1709 = vmul.f32 1.0, %v1708
    %v1710 = vrcp.pop %v1707
    %v1711 = vmul.f32 1.0, %v1710
    %v1714 = vcombine.low %v1709, %v1711
    %v1716 = vunpack.c.l.s4 1966171168
    %v1717 = vunpack.c.0.s8 %v1716
    %v1718 = vlaneseq
    %v1719 = vshrl.u32 %v1718, 7
    %v1720 = vsub.s32 %v1717, %v1719
    %v1721 = vrot.slane %v1714, %v1720
    %v1723 = vunpack.c.l.s4 1966171168
    %v1724 = vunpack.c.0.s8 %v1723
    %v1725 = vlaneseq
    %v1726 = vshrl.u32 %v1725, 7
    %v1727 = vsub.s32 %v1724, %v1726
    %v1728 = vrot.slane %v1721, %v1727
    %v1730 = vlaneseq
    %vm1731 = vcmp.ge.s32.totalorder %v1730, 0
    %vm1732 = vcmp.lt.s32.totalorder %v1730, 256
    %vm1733 = vmand %vm1731, %vm1732
    %1734 = vst.msk [vmem:[#allocation2] sm:$0x3] %vm1733, %v1728
    // Predicated region
    $region14: #{tpu_custom_call.1} parent=1 // pred_check
      _
    $region15: #{tpu_custom_call.1} parent=1 // pred_check_branch
      %1736 = sbr.rel (0) target = $region17
    $region16: #{tpu_custom_call.1} parent=1 // pred_region
      %s1738 = ssub.s32 32, 32
      %1739 = vsyncadd [#allocation3], %s1738
      %s1741 = sshll.u32 [#allocation2], 4
      %s1742 = int_to_ptr.vmem [resolvable:$true] %s1741
      %1744 = dma.vmem_to_hbm [thread:$0]  %s1742, 32, %s3, [#allocation3]
    $region17: #{tpu_custom_call.1} parent=1 // pred_fallthru
      _
    // Predicated region
    $region18: #{tpu_custom_call.1} parent=1 // pred_check
      _
    $region19: #{tpu_custom_call.1} parent=1 // pred_check_branch
      %1746 = sbr.rel (0) target = $region21
    $region20: #{tpu_custom_call.1} parent=1 // pred_region
      %1747 = dma.done [#allocation3], 32
    $region21: #{tpu_custom_call.1} parent=1 // pred_fallthru
      _
    %1748 = vsyncpa [#allocation3], 1

</llo_original>
